<compile_context>
chip_gen: v7x
topology: tpu7x:2x2x1
jax: 0.10.0
libtpu: 0.0.40
codegen_flags: <defaults>
</compile_context>

<pallas_src>
import functools

import jax
import jax.numpy as jnp
import numpy as np
from jax import lax
from jax.experimental import pallas as pl
from jax.experimental.pallas import tpu as pltpu

LEAKY_ALPHA = 0.2          # pyGAT default alpha
MASK_VALUE = -9e15
_TRANS_B = (((1,), (1,)), ((), ()))   # A @ B^T contraction (supported MXU form)


def _gat_kernel(x_ref, adj_ref, wcat_ref, a1bd_ref, a2bd_ref, fc_ref, out_ref,
                *, nheads, nhid, n_nodes, block_b):
    # Block shapes (per grid step, block_b batch elements):
    #   x_ref    : (block_b*N, F)     flattened batch*nodes
    #   adj_ref  : (block_b, N, N)
    #   wcat_ref : (F, H*nhid)        heads packed along lanes
    #   a1bd_ref : (H, H*nhid)        block-diagonal a1 (row h nonzero in cols h*nhid:...)
    #   a2bd_ref : (H, H*nhid)        block-diagonal a2
    #   fc_ref   : (H*nhid, C)
    #   out_ref  : (block_b, C)
    H, D, N, Bt = nheads, nhid, n_nodes, block_b
    C = out_ref.shape[-1]

    x2 = x_ref[...]                                                   # (Bt*N, F)

    # One wide projection for all heads and all batch elements in the block.
    Wh = jnp.dot(x2, wcat_ref[...], preferred_element_type=jnp.float32)   # (Bt*N, H*D)

    # Attention logits as MXU matmuls (no cross-lane sum reductions):
    #   e1[n, h]  = Wh_h[n] . a1_h     (column form: node index on sublanes)
    #   e2r[h, n] = Wh_h[n] . a2_h     (row form: node index on lanes -> no per-head .T)
    e1 = lax.dot_general(Wh, a1bd_ref[...], _TRANS_B,
                         preferred_element_type=jnp.float32)              # (Bt*N, H)
    e2r = lax.dot_general(a2bd_ref[...], Wh, _TRANS_B,
                          preferred_element_type=jnp.float32)             # (H, Bt*N)

    logits = jnp.zeros((Bt, C), jnp.float32)
    for h in range(H):                                      # static unroll over heads
        Wh_h = Wh[:, h * D:(h + 1) * D]                     # (Bt*N, D)
        fc_h = fc_ref[h * D:(h + 1) * D, :]                 # (D, C)
        pooled_rows = []
        for b in range(Bt):                                 # static unroll over batch block
            r0, r1 = b * N, (b + 1) * N
            e = e1[r0:r1, h:h + 1] + e2r[h:h + 1, r0:r1]    # (N, N) broadcast add
            e = jnp.where(e > 0.0, e, LEAKY_ALPHA * e)      # LeakyReLU
            e = jnp.where(adj_ref[b] > 0.0, e, jnp.float32(MASK_VALUE))

            # Softmax over the neighbor (lane) axis.
            m = jnp.max(e, axis=-1, keepdims=True)
            p = jnp.exp(e - m)
            l = jnp.sum(p, axis=-1, keepdims=True)
            inv = pl.reciprocal(l, approx=True)             # EUP (free VLIW slot)
            inv = inv * (2.0 - l * inv)                     # one Newton step -> ~f32 exact
            attn = p * inv

            hp = jnp.dot(attn, Wh_h[r0:r1, :],
                         preferred_element_type=jnp.float32)            # (N, D)
            # ELU (concat=True branch); clamp exp arg to avoid inf in dead branch.
            hp = jnp.where(hp > 0.0, hp, jnp.exp(jnp.minimum(hp, 0.0)) - 1.0)

            # max-pool over the node axis (F.max_pool2d over dim 2)
            pooled_rows.append(jnp.max(hp, axis=0, keepdims=True))      # (1, D)

        pooled_h = (pooled_rows[0] if Bt == 1
                    else jnp.concatenate(pooled_rows, axis=0))          # (Bt, D)
        # Fold the concat + final FC into a per-head accumulation.
        logits = logits + jnp.dot(pooled_h, fc_h,
                                  preferred_element_type=jnp.float32)   # (Bt, C)

    out_ref[...] = logits           # single (Bt, C) store per grid step


def gat_forward(x, adj, W, a1, a2, FC, *, block_b=None):
    """x: (B,N,F) f32, adj: (B,N,N) f32, W: (H,F,nhid), a1/a2: (H,1,nhid),
    FC: (H*nhid, C).  Returns (B, C) logits."""
    B, N, F = x.shape
    H, _, D = W.shape
    C = FC.shape[1]

    if block_b is None:
        # Whole batch per grid step for small B; cap the per-step footprint for
        # larger B (also keeps >1 grid step so v7x's two TensorCores both work).
        block_b = B if B <= 8 else max(d for d in (8, 4, 2, 1) if B % d == 0)
    assert B % block_b == 0, "batch must be divisible by block_b"

    # Pack per-head weights along the lane dimension -> one wide projection matmul.
    w_cat = jnp.transpose(W, (1, 0, 2)).reshape(F, H * D)               # (F, H*D)

    # Block-diagonal attention vectors: row h is a1_h/a2_h in columns h*D:(h+1)*D.
    eye = jnp.eye(H, dtype=W.dtype)
    a1_bd = (eye[:, :, None] * a1[:, 0, :][None, :, :]).reshape(H, H * D)
    a2_bd = (eye[:, :, None] * a2[:, 0, :][None, :, :]).reshape(H, H * D)

    # Flatten (B, N, F) -> (B*N, F) outside the kernel (free at the XLA level).
    x_flat = x.reshape(B * N, F)

    kernel = functools.partial(_gat_kernel, nheads=H, nhid=D,
                               n_nodes=N, block_b=block_b)

    out = pl.pallas_call(
        kernel,
        out_shape=jax.ShapeDtypeStruct((B, C), jnp.float32),
        grid_spec=pltpu.PrefetchScalarGridSpec(
            num_scalar_prefetch=0,
            grid=(B // block_b,),
            in_specs=[
                pl.BlockSpec((block_b * N, F), lambda b: (b, 0)),
                pl.BlockSpec((block_b, N, N), lambda b: (b, 0, 0)),
                pl.BlockSpec((F, H * D), lambda b: (0, 0)),
                pl.BlockSpec((H, H * D), lambda b: (0, 0)),
                pl.BlockSpec((H, H * D), lambda b: (0, 0)),
                pl.BlockSpec((H * D, C), lambda b: (0, 0)),
            ],
            out_specs=pl.BlockSpec((block_b, C), lambda b: (b, 0)),
        ),
        # Default scoped VMEM is plenty at these shapes; raise vmem_limit_bytes
        # here when scaling N / block_b (see TODO at top for v7x re-tiling).
        compiler_params=pltpu.CompilerParams(
            dimension_semantics=("parallel",)),
    )(x_flat, adj, w_cat, a1_bd, a2_bd, FC)
    return out


def _xavier_uniform(key, shape, gain):
    fan_in, fan_out = shape[-2], shape[-1]
    bound = gain * np.sqrt(6.0 / (fan_in + fan_out))
    return jax.random.uniform(key, shape, jnp.float32, -bound, bound)


def _reference(x, adj, W, a1, a2, FC):
    """Pure-JAX reference of the same forward pass."""
    heads = []
    for h in range(W.shape[0]):
        Wh = jnp.einsum('bnf,fd->bnd', x, W[h])
        e1 = jnp.sum(Wh * a1[h][None], axis=-1, keepdims=True)     # (B,N,1)
        e2 = jnp.sum(Wh * a2[h][None], axis=-1, keepdims=True)     # (B,N,1)
        e = e1 + jnp.swapaxes(e2, 1, 2)
        e = jnp.where(e > 0, e, LEAKY_ALPHA * e)
        e = jnp.where(adj > 0, e, MASK_VALUE)
        attn = jax.nn.softmax(e, axis=-1)
        hp = jnp.einsum('bnm,bmd->bnd', attn, Wh)
        heads.append(jax.nn.elu(hp))
    xcat = jnp.concatenate(heads, axis=2)          # (B, N, H*nhid)
    pooled = jnp.max(xcat, axis=1)                 # (B, H*nhid)
    return pooled @ FC                             # (B, C)


if __name__ == "__main__":
    # Small shapes consistent with the module's forward.
    B, N = 2, 16          # batch, nodes
    nfeat, nhid = 8, 8
    nheads, nclass = 4, 4
    gain = 1.414

    key = jax.random.PRNGKey(0)
    k_x, k_adj, k_w, k_a, k_fc = jax.random.split(key, 5)

    x = jax.random.normal(k_x, (B, N, nfeat), jnp.float32)
    # dense adjacency with self loops, 0/1 mask
    adj_rand = jax.random.uniform(k_adj, (B, N, N))
    adj = (adj_rand > 0.5).astype(jnp.float32)
    eye = jnp.broadcast_to(jnp.eye(N, dtype=jnp.float32), (B, N, N))
    adj = jnp.maximum(adj, eye)

    # Per-head GraphAttentionLayer params: W (nfeat,nhid), a (2*nhid,1) split
    # into a1 (first nhid rows) and a2 (last nhid rows).
    W = _xavier_uniform(k_w, (nheads, nfeat, nhid), gain)
    a_full = _xavier_uniform(k_a, (nheads, 2 * nhid, 1), gain)
    a1 = a_full[:, :nhid, 0][:, None, :]   # (H, 1, nhid)
    a2 = a_full[:, nhid:, 0][:, None, :]   # (H, 1, nhid)
    FC = _xavier_uniform(k_fc, (nhid * nheads, nclass), gain)

    out = jax.jit(gat_forward)(x, adj, W, a1, a2, FC)
    jax.block_until_ready(out)

    ref = _reference(x, adj, W, a1, a2, FC)
    np.testing.assert_allclose(np.asarray(out), np.asarray(ref),
                               rtol=1e-4, atol=1e-4)
    print("KERNEL_OK")
</pallas_src>

<mosaic_0001>
module attributes {stable_mosaic.version = 11 : i64} {
  func.func @_gat_kernel(%arg0: i32, %arg1: memref<32x8xf32, #tpu.memory_space<vmem>>, %arg2: memref<2x16x16xf32, #tpu.memory_space<vmem>>, %arg3: memref<8x32xf32, #tpu.memory_space<vmem>>, %arg4: memref<4x32xf32, #tpu.memory_space<vmem>>, %arg5: memref<4x32xf32, #tpu.memory_space<vmem>>, %arg6: memref<32x4xf32, #tpu.memory_space<vmem>>, %arg7: memref<2x4xf32, #tpu.memory_space<vmem>>) attributes {dimension_semantics = [#tpu.dimension_semantics<parallel>], iteration_bounds = array<i64: 1>, scalar_prefetch = 0 : i64, scratch_operands = 0 : i64, tpu.core_type = #tpu.core_type<tc>, window_params = [{transform_indices = @transform_0, window_bounds = array<i64: 32, 8>}, {transform_indices = @transform_1, window_bounds = array<i64: 2, 16, 16>}, {pipeline_mode = #tpu.pipeline_mode<synchronous>, transform_indices = @transform_2, window_bounds = array<i64: 8, 32>}, {pipeline_mode = #tpu.pipeline_mode<synchronous>, transform_indices = @transform_3, window_bounds = array<i64: 4, 32>}, {pipeline_mode = #tpu.pipeline_mode<synchronous>, transform_indices = @transform_4, window_bounds = array<i64: 4, 32>}, {pipeline_mode = #tpu.pipeline_mode<synchronous>, transform_indices = @transform_5, window_bounds = array<i64: 32, 4>}, {transform_indices = @transform_6, window_bounds = array<i64: 2, 4>}]} {
    %c0 = arith.constant 0 : index
    %c0_0 = arith.constant 0 : index
    %0 = vector.load %arg1[%c0, %c0_0] : memref<32x8xf32, #tpu.memory_space<vmem>>, vector<32x8xf32>
    %c0_1 = arith.constant 0 : index
    %c0_2 = arith.constant 0 : index
    %1 = vector.load %arg3[%c0_1, %c0_2] : memref<8x32xf32, #tpu.memory_space<vmem>>, vector<8x32xf32>
    %cst = arith.constant dense<0.000000e+00> : vector<32x32xf32>
    %2 = tpu.matmul %0, %1, %cst {dimension_numbers = #tpu.dot_dimension_numbers<[1], [0], [0], [1], [0, 0, 1, 1], [], []>} : vector<32x8xf32>, vector<8x32xf32>, vector<32x32xf32> -> vector<32x32xf32>
    %c0_3 = arith.constant 0 : index
    %c0_4 = arith.constant 0 : index
    %3 = vector.load %arg4[%c0_3, %c0_4] : memref<4x32xf32, #tpu.memory_space<vmem>>, vector<4x32xf32>
    %cst_5 = arith.constant dense<0.000000e+00> : vector<32x4xf32>
    %4 = tpu.matmul %2, %3, %cst_5 {dimension_numbers = #tpu.dot_dimension_numbers<[1], [1], [0], [0], [0, 0, 1, 0], [], []>} : vector<32x32xf32>, vector<4x32xf32>, vector<32x4xf32> -> vector<32x4xf32>
    %c0_6 = arith.constant 0 : index
    %c0_7 = arith.constant 0 : index
    %5 = vector.load %arg5[%c0_6, %c0_7] : memref<4x32xf32, #tpu.memory_space<vmem>>, vector<4x32xf32>
    %cst_8 = arith.constant dense<0.000000e+00> : vector<4x32xf32>
    %6 = tpu.matmul %5, %2, %cst_8 {dimension_numbers = #tpu.dot_dimension_numbers<[1], [1], [0], [0], [0, 0, 1, 0], [], []>} : vector<4x32xf32>, vector<32x32xf32>, vector<4x32xf32> -> vector<4x32xf32>
    %cst_9 = arith.constant 0.000000e+00 : f32
    %7 = vector.broadcast %cst_9 : f32 to vector<2x4xf32>
    %8 = vector.extract_strided_slice %2 {offsets = [0, 0], sizes = [32, 8], strides = [1, 1]} : vector<32x32xf32> to vector<32x8xf32>
    %c0_10 = arith.constant 0 : index
    %c0_11 = arith.constant 0 : index
    %9 = vector.load %arg6[%c0_10, %c0_11] : memref<32x4xf32, #tpu.memory_space<vmem>>, vector<8x4xf32>
    %10 = vector.extract_strided_slice %4 {offsets = [0, 0], sizes = [16, 1], strides = [1, 1]} : vector<32x4xf32> to vector<16x1xf32>
    %11 = vector.extract_strided_slice %6 {offsets = [0, 0], sizes = [1, 16], strides = [1, 1]} : vector<4x32xf32> to vector<1x16xf32>
    %12 = vector.broadcast %10 : vector<16x1xf32> to vector<16x16xf32>
    %13 = vector.broadcast %11 : vector<1x16xf32> to vector<16x16xf32>
    %14 = arith.addf %12, %13 : vector<16x16xf32>
    %cst_12 = arith.constant 0.000000e+00 : f32
    %15 = vector.broadcast %cst_12 : f32 to vector<16x16xf32>
    %16 = arith.cmpf ogt, %14, %15 : vector<16x16xf32>
    %cst_13 = arith.constant 2.000000e-01 : f32
    %17 = vector.broadcast %cst_13 : f32 to vector<16x16xf32>
    %18 = arith.mulf %17, %14 : vector<16x16xf32>
    %19 = arith.select %16, %14, %18 : vector<16x16xi1>, vector<16x16xf32>
    %c0_14 = arith.constant 0 : index
    %c0_15 = arith.constant 0 : index
    %c0_16 = arith.constant 0 : index
    %20 = vector.load %arg2[%c0_14, %c0_15, %c0_16] : memref<2x16x16xf32, #tpu.memory_space<vmem>>, vector<1x16x16xf32>
    %21 = vector.shape_cast %20 : vector<1x16x16xf32> to vector<16x16xf32>
    %cst_17 = arith.constant 0.000000e+00 : f32
    %22 = vector.broadcast %cst_17 : f32 to vector<16x16xf32>
    %23 = arith.cmpf ogt, %21, %22 : vector<16x16xf32>
    %cst_18 = arith.constant -9.000000e+15 : f32
    %24 = vector.broadcast %cst_18 : f32 to vector<16x16xf32>
    %25 = arith.select %23, %19, %24 : vector<16x16xi1>, vector<16x16xf32>
    %cst_19 = arith.constant dense<0xFF800000> : vector<16xf32>
    %26 = vector.multi_reduction <maximumf>, %25, %cst_19 [1] : vector<16x16xf32> to vector<16xf32>
    %27 = vector.shape_cast %26 : vector<16xf32> to vector<16x1xf32>
    %28 = vector.broadcast %27 : vector<16x1xf32> to vector<16x16xf32>
    %29 = arith.subf %25, %28 : vector<16x16xf32>
    %30 = math.exp %29 : vector<16x16xf32>
    %cst_20 = arith.constant dense<0.000000e+00> : vector<16xf32>
    %31 = vector.multi_reduction <add>, %30, %cst_20 [1] : vector<16x16xf32> to vector<16xf32>
    %32 = vector.shape_cast %31 : vector<16xf32> to vector<16x1xf32>
    %33 = tpu.reciprocal %32 {approx = true} : vector<16x1xf32> -> vector<16x1xf32>
    %34 = arith.mulf %32, %33 : vector<16x1xf32>
    %cst_21 = arith.constant 2.000000e+00 : f32
    %35 = vector.broadcast %cst_21 : f32 to vector<16x1xf32>
    %36 = arith.subf %35, %34 : vector<16x1xf32>
    %37 = arith.mulf %33, %36 : vector<16x1xf32>
    %38 = vector.broadcast %37 : vector<16x1xf32> to vector<16x16xf32>
    %39 = arith.mulf %30, %38 : vector<16x16xf32>
    %40 = vector.extract_strided_slice %8 {offsets = [0, 0], sizes = [16, 8], strides = [1, 1]} : vector<32x8xf32> to vector<16x8xf32>
    %cst_22 = arith.constant dense<0.000000e+00> : vector<16x8xf32>
    %41 = tpu.matmul %39, %40, %cst_22 {dimension_numbers = #tpu.dot_dimension_numbers<[1], [0], [0], [1], [0, 0, 1, 1], [], []>} : vector<16x16xf32>, vector<16x8xf32>, vector<16x8xf32> -> vector<16x8xf32>
    %cst_23 = arith.constant 0.000000e+00 : f32
    %42 = vector.broadcast %cst_23 : f32 to vector<16x8xf32>
    %43 = arith.cmpf ogt, %41, %42 : vector<16x8xf32>
    %cst_24 = arith.constant 0.000000e+00 : f32
    %44 = vector.broadcast %cst_24 : f32 to vector<16x8xf32>
    %45 = arith.minimumf %41, %44 : vector<16x8xf32>
    %46 = math.exp %45 : vector<16x8xf32>
    %cst_25 = arith.constant 1.000000e+00 : f32
    %47 = vector.broadcast %cst_25 : f32 to vector<16x8xf32>
    %48 = arith.subf %46, %47 : vector<16x8xf32>
    %49 = arith.select %43, %41, %48 : vector<16x8xi1>, vector<16x8xf32>
    %cst_26 = arith.constant dense<0xFF800000> : vector<8xf32>
    %50 = vector.multi_reduction <maximumf>, %49, %cst_26 [0] : vector<16x8xf32> to vector<8xf32>
    %51 = vector.shape_cast %50 : vector<8xf32> to vector<1x8xf32>
    %52 = vector.extract_strided_slice %4 {offsets = [16, 0], sizes = [16, 1], strides = [1, 1]} : vector<32x4xf32> to vector<16x1xf32>
    %53 = vector.extract_strided_slice %6 {offsets = [0, 16], sizes = [1, 16], strides = [1, 1]} : vector<4x32xf32> to vector<1x16xf32>
    %54 = vector.broadcast %52 : vector<16x1xf32> to vector<16x16xf32>
    %55 = vector.broadcast %53 : vector<1x16xf32> to vector<16x16xf32>
    %56 = arith.addf %54, %55 : vector<16x16xf32>
    %cst_27 = arith.constant 0.000000e+00 : f32
    %57 = vector.broadcast %cst_27 : f32 to vector<16x16xf32>
    %58 = arith.cmpf ogt, %56, %57 : vector<16x16xf32>
    %cst_28 = arith.constant 2.000000e-01 : f32
    %59 = vector.broadcast %cst_28 : f32 to vector<16x16xf32>
    %60 = arith.mulf %59, %56 : vector<16x16xf32>
    %61 = arith.select %58, %56, %60 : vector<16x16xi1>, vector<16x16xf32>
    %c1 = arith.constant 1 : index
    %c0_29 = arith.constant 0 : index
    %c0_30 = arith.constant 0 : index
    %62 = vector.load %arg2[%c1, %c0_29, %c0_30] : memref<2x16x16xf32, #tpu.memory_space<vmem>>, vector<1x16x16xf32>
    %63 = vector.shape_cast %62 : vector<1x16x16xf32> to vector<16x16xf32>
    %cst_31 = arith.constant 0.000000e+00 : f32
    %64 = vector.broadcast %cst_31 : f32 to vector<16x16xf32>
    %65 = arith.cmpf ogt, %63, %64 : vector<16x16xf32>
    %cst_32 = arith.constant -9.000000e+15 : f32
    %66 = vector.broadcast %cst_32 : f32 to vector<16x16xf32>
    %67 = arith.select %65, %61, %66 : vector<16x16xi1>, vector<16x16xf32>
    %cst_33 = arith.constant dense<0xFF800000> : vector<16xf32>
    %68 = vector.multi_reduction <maximumf>, %67, %cst_33 [1] : vector<16x16xf32> to vector<16xf32>
    %69 = vector.shape_cast %68 : vector<16xf32> to vector<16x1xf32>
    %70 = vector.broadcast %69 : vector<16x1xf32> to vector<16x16xf32>
    %71 = arith.subf %67, %70 : vector<16x16xf32>
    %72 = math.exp %71 : vector<16x16xf32>
    %cst_34 = arith.constant dense<0.000000e+00> : vector<16xf32>
    %73 = vector.multi_reduction <add>, %72, %cst_34 [1] : vector<16x16xf32> to vector<16xf32>
    %74 = vector.shape_cast %73 : vector<16xf32> to vector<16x1xf32>
    %75 = tpu.reciprocal %74 {approx = true} : vector<16x1xf32> -> vector<16x1xf32>
    %76 = arith.mulf %74, %75 : vector<16x1xf32>
    %cst_35 = arith.constant 2.000000e+00 : f32
    %77 = vector.broadcast %cst_35 : f32 to vector<16x1xf32>
    %78 = arith.subf %77, %76 : vector<16x1xf32>
    %79 = arith.mulf %75, %78 : vector<16x1xf32>
    %80 = vector.broadcast %79 : vector<16x1xf32> to vector<16x16xf32>
    %81 = arith.mulf %72, %80 : vector<16x16xf32>
    %82 = vector.extract_strided_slice %8 {offsets = [16, 0], sizes = [16, 8], strides = [1, 1]} : vector<32x8xf32> to vector<16x8xf32>
    %cst_36 = arith.constant dense<0.000000e+00> : vector<16x8xf32>
    %83 = tpu.matmul %81, %82, %cst_36 {dimension_numbers = #tpu.dot_dimension_numbers<[1], [0], [0], [1], [0, 0, 1, 1], [], []>} : vector<16x16xf32>, vector<16x8xf32>, vector<16x8xf32> -> vector<16x8xf32>
    %cst_37 = arith.constant 0.000000e+00 : f32
    %84 = vector.broadcast %cst_37 : f32 to vector<16x8xf32>
    %85 = arith.cmpf ogt, %83, %84 : vector<16x8xf32>
    %cst_38 = arith.constant 0.000000e+00 : f32
    %86 = vector.broadcast %cst_38 : f32 to vector<16x8xf32>
    %87 = arith.minimumf %83, %86 : vector<16x8xf32>
    %88 = math.exp %87 : vector<16x8xf32>
    %cst_39 = arith.constant 1.000000e+00 : f32
    %89 = vector.broadcast %cst_39 : f32 to vector<16x8xf32>
    %90 = arith.subf %88, %89 : vector<16x8xf32>
    %91 = arith.select %85, %83, %90 : vector<16x8xi1>, vector<16x8xf32>
    %cst_40 = arith.constant dense<0xFF800000> : vector<8xf32>
    %92 = vector.multi_reduction <maximumf>, %91, %cst_40 [0] : vector<16x8xf32> to vector<8xf32>
    %93 = vector.shape_cast %92 : vector<8xf32> to vector<1x8xf32>
    %94 = tpu.concatenate %51, %93 in 0 : vector<1x8xf32>, vector<1x8xf32> -> vector<2x8xf32>
    %cst_41 = arith.constant dense<0.000000e+00> : vector<2x4xf32>
    %95 = tpu.matmul %94, %9, %cst_41 {dimension_numbers = #tpu.dot_dimension_numbers<[1], [0], [0], [1], [0, 0, 1, 1], [], []>} : vector<2x8xf32>, vector<8x4xf32>, vector<2x4xf32> -> vector<2x4xf32>
    %96 = arith.addf %7, %95 : vector<2x4xf32>
    %97 = vector.extract_strided_slice %2 {offsets = [0, 8], sizes = [32, 8], strides = [1, 1]} : vector<32x32xf32> to vector<32x8xf32>
    %c8 = arith.constant 8 : index
    %c0_42 = arith.constant 0 : index
    %98 = vector.load %arg6[%c8, %c0_42] : memref<32x4xf32, #tpu.memory_space<vmem>>, vector<8x4xf32>
    %99 = vector.extract_strided_slice %4 {offsets = [0, 1], sizes = [16, 1], strides = [1, 1]} : vector<32x4xf32> to vector<16x1xf32>
    %100 = vector.extract_strided_slice %6 {offsets = [1, 0], sizes = [1, 16], strides = [1, 1]} : vector<4x32xf32> to vector<1x16xf32>
    %101 = vector.broadcast %99 : vector<16x1xf32> to vector<16x16xf32>
    %102 = vector.broadcast %100 : vector<1x16xf32> to vector<16x16xf32>
    %103 = arith.addf %101, %102 : vector<16x16xf32>
    %cst_43 = arith.constant 0.000000e+00 : f32
    %104 = vector.broadcast %cst_43 : f32 to vector<16x16xf32>
    %105 = arith.cmpf ogt, %103, %104 : vector<16x16xf32>
    %cst_44 = arith.constant 2.000000e-01 : f32
    %106 = vector.broadcast %cst_44 : f32 to vector<16x16xf32>
    %107 = arith.mulf %106, %103 : vector<16x16xf32>
    %108 = arith.select %105, %103, %107 : vector<16x16xi1>, vector<16x16xf32>
    %c0_45 = arith.constant 0 : index
    %c0_46 = arith.constant 0 : index
    %c0_47 = arith.constant 0 : index
    %109 = vector.load %arg2[%c0_45, %c0_46, %c0_47] : memref<2x16x16xf32, #tpu.memory_space<vmem>>, vector<1x16x16xf32>
    %110 = vector.shape_cast %109 : vector<1x16x16xf32> to vector<16x16xf32>
    %cst_48 = arith.constant 0.000000e+00 : f32
    %111 = vector.broadcast %cst_48 : f32 to vector<16x16xf32>
    %112 = arith.cmpf ogt, %110, %111 : vector<16x16xf32>
    %cst_49 = arith.constant -9.000000e+15 : f32
    %113 = vector.broadcast %cst_49 : f32 to vector<16x16xf32>
    %114 = arith.select %112, %108, %113 : vector<16x16xi1>, vector<16x16xf32>
    %cst_50 = arith.constant dense<0xFF800000> : vector<16xf32>
    %115 = vector.multi_reduction <maximumf>, %114, %cst_50 [1] : vector<16x16xf32> to vector<16xf32>
    %116 = vector.shape_cast %115 : vector<16xf32> to vector<16x1xf32>
    %117 = vector.broadcast %116 : vector<16x1xf32> to vector<16x16xf32>
    %118 = arith.subf %114, %117 : vector<16x16xf32>
    %119 = math.exp %118 : vector<16x16xf32>
    %cst_51 = arith.constant dense<0.000000e+00> : vector<16xf32>
    %120 = vector.multi_reduction <add>, %119, %cst_51 [1] : vector<16x16xf32> to vector<16xf32>
    %121 = vector.shape_cast %120 : vector<16xf32> to vector<16x1xf32>
    %122 = tpu.reciprocal %121 {approx = true} : vector<16x1xf32> -> vector<16x1xf32>
    %123 = arith.mulf %121, %122 : vector<16x1xf32>
    %cst_52 = arith.constant 2.000000e+00 : f32
    %124 = vector.broadcast %cst_52 : f32 to vector<16x1xf32>
    %125 = arith.subf %124, %123 : vector<16x1xf32>
    %126 = arith.mulf %122, %125 : vector<16x1xf32>
    %127 = vector.broadcast %126 : vector<16x1xf32> to vector<16x16xf32>
    %128 = arith.mulf %119, %127 : vector<16x16xf32>
    %129 = vector.extract_strided_slice %97 {offsets = [0, 0], sizes = [16, 8], strides = [1, 1]} : vector<32x8xf32> to vector<16x8xf32>
    %cst_53 = arith.constant dense<0.000000e+00> : vector<16x8xf32>
    %130 = tpu.matmul %128, %129, %cst_53 {dimension_numbers = #tpu.dot_dimension_numbers<[1], [0], [0], [1], [0, 0, 1, 1], [], []>} : vector<16x16xf32>, vector<16x8xf32>, vector<16x8xf32> -> vector<16x8xf32>
    %cst_54 = arith.constant 0.000000e+00 : f32
    %131 = vector.broadcast %cst_54 : f32 to vector<16x8xf32>
    %132 = arith.cmpf ogt, %130, %131 : vector<16x8xf32>
    %cst_55 = arith.constant 0.000000e+00 : f32
    %133 = vector.broadcast %cst_55 : f32 to vector<16x8xf32>
    %134 = arith.minimumf %130, %133 : vector<16x8xf32>
    %135 = math.exp %134 : vector<16x8xf32>
    %cst_56 = arith.constant 1.000000e+00 : f32
    %136 = vector.broadcast %cst_56 : f32 to vector<16x8xf32>
    %137 = arith.subf %135, %136 : vector<16x8xf32>
    %138 = arith.select %132, %130, %137 : vector<16x8xi1>, vector<16x8xf32>
    %cst_57 = arith.constant dense<0xFF800000> : vector<8xf32>
    %139 = vector.multi_reduction <maximumf>, %138, %cst_57 [0] : vector<16x8xf32> to vector<8xf32>
    %140 = vector.shape_cast %139 : vector<8xf32> to vector<1x8xf32>
    %141 = vector.extract_strided_slice %4 {offsets = [16, 1], sizes = [16, 1], strides = [1, 1]} : vector<32x4xf32> to vector<16x1xf32>
    %142 = vector.extract_strided_slice %6 {offsets = [1, 16], sizes = [1, 16], strides = [1, 1]} : vector<4x32xf32> to vector<1x16xf32>
    %143 = vector.broadcast %141 : vector<16x1xf32> to vector<16x16xf32>
    %144 = vector.broadcast %142 : vector<1x16xf32> to vector<16x16xf32>
    %145 = arith.addf %143, %144 : vector<16x16xf32>
    %cst_58 = arith.constant 0.000000e+00 : f32
    %146 = vector.broadcast %cst_58 : f32 to vector<16x16xf32>
    %147 = arith.cmpf ogt, %145, %146 : vector<16x16xf32>
    %cst_59 = arith.constant 2.000000e-01 : f32
    %148 = vector.broadcast %cst_59 : f32 to vector<16x16xf32>
    %149 = arith.mulf %148, %145 : vector<16x16xf32>
    %150 = arith.select %147, %145, %149 : vector<16x16xi1>, vector<16x16xf32>
    %c1_60 = arith.constant 1 : index
    %c0_61 = arith.constant 0 : index
    %c0_62 = arith.constant 0 : index
    %151 = vector.load %arg2[%c1_60, %c0_61, %c0_62] : memref<2x16x16xf32, #tpu.memory_space<vmem>>, vector<1x16x16xf32>
    %152 = vector.shape_cast %151 : vector<1x16x16xf32> to vector<16x16xf32>
    %cst_63 = arith.constant 0.000000e+00 : f32
    %153 = vector.broadcast %cst_63 : f32 to vector<16x16xf32>
    %154 = arith.cmpf ogt, %152, %153 : vector<16x16xf32>
    %cst_64 = arith.constant -9.000000e+15 : f32
    %155 = vector.broadcast %cst_64 : f32 to vector<16x16xf32>
    %156 = arith.select %154, %150, %155 : vector<16x16xi1>, vector<16x16xf32>
    %cst_65 = arith.constant dense<0xFF800000> : vector<16xf32>
    %157 = vector.multi_reduction <maximumf>, %156, %cst_65 [1] : vector<16x16xf32> to vector<16xf32>
    %158 = vector.shape_cast %157 : vector<16xf32> to vector<16x1xf32>
    %159 = vector.broadcast %158 : vector<16x1xf32> to vector<16x16xf32>
    %160 = arith.subf %156, %159 : vector<16x16xf32>
    %161 = math.exp %160 : vector<16x16xf32>
    %cst_66 = arith.constant dense<0.000000e+00> : vector<16xf32>
    %162 = vector.multi_reduction <add>, %161, %cst_66 [1] : vector<16x16xf32> to vector<16xf32>
    %163 = vector.shape_cast %162 : vector<16xf32> to vector<16x1xf32>
    %164 = tpu.reciprocal %163 {approx = true} : vector<16x1xf32> -> vector<16x1xf32>
    %165 = arith.mulf %163, %164 : vector<16x1xf32>
    %cst_67 = arith.constant 2.000000e+00 : f32
    %166 = vector.broadcast %cst_67 : f32 to vector<16x1xf32>
    %167 = arith.subf %166, %165 : vector<16x1xf32>
    %168 = arith.mulf %164, %167 : vector<16x1xf32>
    %169 = vector.broadcast %168 : vector<16x1xf32> to vector<16x16xf32>
    %170 = arith.mulf %161, %169 : vector<16x16xf32>
    %171 = vector.extract_strided_slice %97 {offsets = [16, 0], sizes = [16, 8], strides = [1, 1]} : vector<32x8xf32> to vector<16x8xf32>
    %cst_68 = arith.constant dense<0.000000e+00> : vector<16x8xf32>
    %172 = tpu.matmul %170, %171, %cst_68 {dimension_numbers = #tpu.dot_dimension_numbers<[1], [0], [0], [1], [0, 0, 1, 1], [], []>} : vector<16x16xf32>, vector<16x8xf32>, vector<16x8xf32> -> vector<16x8xf32>
    %cst_69 = arith.constant 0.000000e+00 : f32
    %173 = vector.broadcast %cst_69 : f32 to vector<16x8xf32>
    %174 = arith.cmpf ogt, %172, %173 : vector<16x8xf32>
    %cst_70 = arith.constant 0.000000e+00 : f32
    %175 = vector.broadcast %cst_70 : f32 to vector<16x8xf32>
    %176 = arith.minimumf %172, %175 : vector<16x8xf32>
    %177 = math.exp %176 : vector<16x8xf32>
    %cst_71 = arith.constant 1.000000e+00 : f32
    %178 = vector.broadcast %cst_71 : f32 to vector<16x8xf32>
    %179 = arith.subf %177, %178 : vector<16x8xf32>
    %180 = arith.select %174, %172, %179 : vector<16x8xi1>, vector<16x8xf32>
    %cst_72 = arith.constant dense<0xFF800000> : vector<8xf32>
    %181 = vector.multi_reduction <maximumf>, %180, %cst_72 [0] : vector<16x8xf32> to vector<8xf32>
    %182 = vector.shape_cast %181 : vector<8xf32> to vector<1x8xf32>
    %183 = tpu.concatenate %140, %182 in 0 : vector<1x8xf32>, vector<1x8xf32> -> vector<2x8xf32>
    %cst_73 = arith.constant dense<0.000000e+00> : vector<2x4xf32>
    %184 = tpu.matmul %183, %98, %cst_73 {dimension_numbers = #tpu.dot_dimension_numbers<[1], [0], [0], [1], [0, 0, 1, 1], [], []>} : vector<2x8xf32>, vector<8x4xf32>, vector<2x4xf32> -> vector<2x4xf32>
    %185 = arith.addf %96, %184 : vector<2x4xf32>
    %186 = vector.extract_strided_slice %2 {offsets = [0, 16], sizes = [32, 8], strides = [1, 1]} : vector<32x32xf32> to vector<32x8xf32>
    %c16 = arith.constant 16 : index
    %c0_74 = arith.constant 0 : index
    %187 = vector.load %arg6[%c16, %c0_74] : memref<32x4xf32, #tpu.memory_space<vmem>>, vector<8x4xf32>
    %188 = vector.extract_strided_slice %4 {offsets = [0, 2], sizes = [16, 1], strides = [1, 1]} : vector<32x4xf32> to vector<16x1xf32>
    %189 = vector.extract_strided_slice %6 {offsets = [2, 0], sizes = [1, 16], strides = [1, 1]} : vector<4x32xf32> to vector<1x16xf32>
    %190 = vector.broadcast %188 : vector<16x1xf32> to vector<16x16xf32>
    %191 = vector.broadcast %189 : vector<1x16xf32> to vector<16x16xf32>
    %192 = arith.addf %190, %191 : vector<16x16xf32>
    %cst_75 = arith.constant 0.000000e+00 : f32
    %193 = vector.broadcast %cst_75 : f32 to vector<16x16xf32>
    %194 = arith.cmpf ogt, %192, %193 : vector<16x16xf32>
    %cst_76 = arith.constant 2.000000e-01 : f32
    %195 = vector.broadcast %cst_76 : f32 to vector<16x16xf32>
    %196 = arith.mulf %195, %192 : vector<16x16xf32>
    %197 = arith.select %194, %192, %196 : vector<16x16xi1>, vector<16x16xf32>
    %c0_77 = arith.constant 0 : index
    %c0_78 = arith.constant 0 : index
    %c0_79 = arith.constant 0 : index
    %198 = vector.load %arg2[%c0_77, %c0_78, %c0_79] : memref<2x16x16xf32, #tpu.memory_space<vmem>>, vector<1x16x16xf32>
    %199 = vector.shape_cast %198 : vector<1x16x16xf32> to vector<16x16xf32>
    %cst_80 = arith.constant 0.000000e+00 : f32
    %200 = vector.broadcast %cst_80 : f32 to vector<16x16xf32>
    %201 = arith.cmpf ogt, %199, %200 : vector<16x16xf32>
    %cst_81 = arith.constant -9.000000e+15 : f32
    %202 = vector.broadcast %cst_81 : f32 to vector<16x16xf32>
    %203 = arith.select %201, %197, %202 : vector<16x16xi1>, vector<16x16xf32>
    %cst_82 = arith.constant dense<0xFF800000> : vector<16xf32>
    %204 = vector.multi_reduction <maximumf>, %203, %cst_82 [1] : vector<16x16xf32> to vector<16xf32>
    %205 = vector.shape_cast %204 : vector<16xf32> to vector<16x1xf32>
    %206 = vector.broadcast %205 : vector<16x1xf32> to vector<16x16xf32>
    %207 = arith.subf %203, %206 : vector<16x16xf32>
    %208 = math.exp %207 : vector<16x16xf32>
    %cst_83 = arith.constant dense<0.000000e+00> : vector<16xf32>
    %209 = vector.multi_reduction <add>, %208, %cst_83 [1] : vector<16x16xf32> to vector<16xf32>
    %210 = vector.shape_cast %209 : vector<16xf32> to vector<16x1xf32>
    %211 = tpu.reciprocal %210 {approx = true} : vector<16x1xf32> -> vector<16x1xf32>
    %212 = arith.mulf %210, %211 : vector<16x1xf32>
    %cst_84 = arith.constant 2.000000e+00 : f32
    %213 = vector.broadcast %cst_84 : f32 to vector<16x1xf32>
    %214 = arith.subf %213, %212 : vector<16x1xf32>
    %215 = arith.mulf %211, %214 : vector<16x1xf32>
    %216 = vector.broadcast %215 : vector<16x1xf32> to vector<16x16xf32>
    %217 = arith.mulf %208, %216 : vector<16x16xf32>
    %218 = vector.extract_strided_slice %186 {offsets = [0, 0], sizes = [16, 8], strides = [1, 1]} : vector<32x8xf32> to vector<16x8xf32>
    %cst_85 = arith.constant dense<0.000000e+00> : vector<16x8xf32>
    %219 = tpu.matmul %217, %218, %cst_85 {dimension_numbers = #tpu.dot_dimension_numbers<[1], [0], [0], [1], [0, 0, 1, 1], [], []>} : vector<16x16xf32>, vector<16x8xf32>, vector<16x8xf32> -> vector<16x8xf32>
    %cst_86 = arith.constant 0.000000e+00 : f32
    %220 = vector.broadcast %cst_86 : f32 to vector<16x8xf32>
    %221 = arith.cmpf ogt, %219, %220 : vector<16x8xf32>
    %cst_87 = arith.constant 0.000000e+00 : f32
    %222 = vector.broadcast %cst_87 : f32 to vector<16x8xf32>
    %223 = arith.minimumf %219, %222 : vector<16x8xf32>
    %224 = math.exp %223 : vector<16x8xf32>
    %cst_88 = arith.constant 1.000000e+00 : f32
    %225 = vector.broadcast %cst_88 : f32 to vector<16x8xf32>
    %226 = arith.subf %224, %225 : vector<16x8xf32>
    %227 = arith.select %221, %219, %226 : vector<16x8xi1>, vector<16x8xf32>
    %cst_89 = arith.constant dense<0xFF800000> : vector<8xf32>
    %228 = vector.multi_reduction <maximumf>, %227, %cst_89 [0] : vector<16x8xf32> to vector<8xf32>
    %229 = vector.shape_cast %228 : vector<8xf32> to vector<1x8xf32>
    %230 = vector.extract_strided_slice %4 {offsets = [16, 2], sizes = [16, 1], strides = [1, 1]} : vector<32x4xf32> to vector<16x1xf32>
    %231 = vector.extract_strided_slice %6 {offsets = [2, 16], sizes = [1, 16], strides = [1, 1]} : vector<4x32xf32> to vector<1x16xf32>
    %232 = vector.broadcast %230 : vector<16x1xf32> to vector<16x16xf32>
    %233 = vector.broadcast %231 : vector<1x16xf32> to vector<16x16xf32>
    %234 = arith.addf %232, %233 : vector<16x16xf32>
    %cst_90 = arith.constant 0.000000e+00 : f32
    %235 = vector.broadcast %cst_90 : f32 to vector<16x16xf32>
    %236 = arith.cmpf ogt, %234, %235 : vector<16x16xf32>
    %cst_91 = arith.constant 2.000000e-01 : f32
    %237 = vector.broadcast %cst_91 : f32 to vector<16x16xf32>
    %238 = arith.mulf %237, %234 : vector<16x16xf32>
    %239 = arith.select %236, %234, %238 : vector<16x16xi1>, vector<16x16xf32>
    %c1_92 = arith.constant 1 : index
    %c0_93 = arith.constant 0 : index
    %c0_94 = arith.constant 0 : index
    %240 = vector.load %arg2[%c1_92, %c0_93, %c0_94] : memref<2x16x16xf32, #tpu.memory_space<vmem>>, vector<1x16x16xf32>
    %241 = vector.shape_cast %240 : vector<1x16x16xf32> to vector<16x16xf32>
    %cst_95 = arith.constant 0.000000e+00 : f32
    %242 = vector.broadcast %cst_95 : f32 to vector<16x16xf32>
    %243 = arith.cmpf ogt, %241, %242 : vector<16x16xf32>
    %cst_96 = arith.constant -9.000000e+15 : f32
    %244 = vector.broadcast %cst_96 : f32 to vector<16x16xf32>
    %245 = arith.select %243, %239, %244 : vector<16x16xi1>, vector<16x16xf32>
    %cst_97 = arith.constant dense<0xFF800000> : vector<16xf32>
    %246 = vector.multi_reduction <maximumf>, %245, %cst_97 [1] : vector<16x16xf32> to vector<16xf32>
    %247 = vector.shape_cast %246 : vector<16xf32> to vector<16x1xf32>
    %248 = vector.broadcast %247 : vector<16x1xf32> to vector<16x16xf32>
    %249 = arith.subf %245, %248 : vector<16x16xf32>
    %250 = math.exp %249 : vector<16x16xf32>
    %cst_98 = arith.constant dense<0.000000e+00> : vector<16xf32>
    %251 = vector.multi_reduction <add>, %250, %cst_98 [1] : vector<16x16xf32> to vector<16xf32>
    %252 = vector.shape_cast %251 : vector<16xf32> to vector<16x1xf32>
    %253 = tpu.reciprocal %252 {approx = true} : vector<16x1xf32> -> vector<16x1xf32>
    %254 = arith.mulf %252, %253 : vector<16x1xf32>
    %cst_99 = arith.constant 2.000000e+00 : f32
    %255 = vector.broadcast %cst_99 : f32 to vector<16x1xf32>
    %256 = arith.subf %255, %254 : vector<16x1xf32>
    %257 = arith.mulf %253, %256 : vector<16x1xf32>
    %258 = vector.broadcast %257 : vector<16x1xf32> to vector<16x16xf32>
    %259 = arith.mulf %250, %258 : vector<16x16xf32>
    %260 = vector.extract_strided_slice %186 {offsets = [16, 0], sizes = [16, 8], strides = [1, 1]} : vector<32x8xf32> to vector<16x8xf32>
    %cst_100 = arith.constant dense<0.000000e+00> : vector<16x8xf32>
    %261 = tpu.matmul %259, %260, %cst_100 {dimension_numbers = #tpu.dot_dimension_numbers<[1], [0], [0], [1], [0, 0, 1, 1], [], []>} : vector<16x16xf32>, vector<16x8xf32>, vector<16x8xf32> -> vector<16x8xf32>
    %cst_101 = arith.constant 0.000000e+00 : f32
    %262 = vector.broadcast %cst_101 : f32 to vector<16x8xf32>
    %263 = arith.cmpf ogt, %261, %262 : vector<16x8xf32>
    %cst_102 = arith.constant 0.000000e+00 : f32
    %264 = vector.broadcast %cst_102 : f32 to vector<16x8xf32>
    %265 = arith.minimumf %261, %264 : vector<16x8xf32>
    %266 = math.exp %265 : vector<16x8xf32>
    %cst_103 = arith.constant 1.000000e+00 : f32
    %267 = vector.broadcast %cst_103 : f32 to vector<16x8xf32>
    %268 = arith.subf %266, %267 : vector<16x8xf32>
    %269 = arith.select %263, %261, %268 : vector<16x8xi1>, vector<16x8xf32>
    %cst_104 = arith.constant dense<0xFF800000> : vector<8xf32>
    %270 = vector.multi_reduction <maximumf>, %269, %cst_104 [0] : vector<16x8xf32> to vector<8xf32>
    %271 = vector.shape_cast %270 : vector<8xf32> to vector<1x8xf32>
    %272 = tpu.concatenate %229, %271 in 0 : vector<1x8xf32>, vector<1x8xf32> -> vector<2x8xf32>
    %cst_105 = arith.constant dense<0.000000e+00> : vector<2x4xf32>
    %273 = tpu.matmul %272, %187, %cst_105 {dimension_numbers = #tpu.dot_dimension_numbers<[1], [0], [0], [1], [0, 0, 1, 1], [], []>} : vector<2x8xf32>, vector<8x4xf32>, vector<2x4xf32> -> vector<2x4xf32>
    %274 = arith.addf %185, %273 : vector<2x4xf32>
    %275 = vector.extract_strided_slice %2 {offsets = [0, 24], sizes = [32, 8], strides = [1, 1]} : vector<32x32xf32> to vector<32x8xf32>
    %c24 = arith.constant 24 : index
    %c0_106 = arith.constant 0 : index
    %276 = vector.load %arg6[%c24, %c0_106] : memref<32x4xf32, #tpu.memory_space<vmem>>, vector<8x4xf32>
    %277 = vector.extract_strided_slice %4 {offsets = [0, 3], sizes = [16, 1], strides = [1, 1]} : vector<32x4xf32> to vector<16x1xf32>
    %278 = vector.extract_strided_slice %6 {offsets = [3, 0], sizes = [1, 16], strides = [1, 1]} : vector<4x32xf32> to vector<1x16xf32>
    %279 = vector.broadcast %277 : vector<16x1xf32> to vector<16x16xf32>
    %280 = vector.broadcast %278 : vector<1x16xf32> to vector<16x16xf32>
    %281 = arith.addf %279, %280 : vector<16x16xf32>
    %cst_107 = arith.constant 0.000000e+00 : f32
    %282 = vector.broadcast %cst_107 : f32 to vector<16x16xf32>
    %283 = arith.cmpf ogt, %281, %282 : vector<16x16xf32>
    %cst_108 = arith.constant 2.000000e-01 : f32
    %284 = vector.broadcast %cst_108 : f32 to vector<16x16xf32>
    %285 = arith.mulf %284, %281 : vector<16x16xf32>
    %286 = arith.select %283, %281, %285 : vector<16x16xi1>, vector<16x16xf32>
    %c0_109 = arith.constant 0 : index
    %c0_110 = arith.constant 0 : index
    %c0_111 = arith.constant 0 : index
    %287 = vector.load %arg2[%c0_109, %c0_110, %c0_111] : memref<2x16x16xf32, #tpu.memory_space<vmem>>, vector<1x16x16xf32>
    %288 = vector.shape_cast %287 : vector<1x16x16xf32> to vector<16x16xf32>
    %cst_112 = arith.constant 0.000000e+00 : f32
    %289 = vector.broadcast %cst_112 : f32 to vector<16x16xf32>
    %290 = arith.cmpf ogt, %288, %289 : vector<16x16xf32>
    %cst_113 = arith.constant -9.000000e+15 : f32
    %291 = vector.broadcast %cst_113 : f32 to vector<16x16xf32>
    %292 = arith.select %290, %286, %291 : vector<16x16xi1>, vector<16x16xf32>
    %cst_114 = arith.constant dense<0xFF800000> : vector<16xf32>
    %293 = vector.multi_reduction <maximumf>, %292, %cst_114 [1] : vector<16x16xf32> to vector<16xf32>
    %294 = vector.shape_cast %293 : vector<16xf32> to vector<16x1xf32>
    %295 = vector.broadcast %294 : vector<16x1xf32> to vector<16x16xf32>
    %296 = arith.subf %292, %295 : vector<16x16xf32>
    %297 = math.exp %296 : vector<16x16xf32>
    %cst_115 = arith.constant dense<0.000000e+00> : vector<16xf32>
    %298 = vector.multi_reduction <add>, %297, %cst_115 [1] : vector<16x16xf32> to vector<16xf32>
    %299 = vector.shape_cast %298 : vector<16xf32> to vector<16x1xf32>
    %300 = tpu.reciprocal %299 {approx = true} : vector<16x1xf32> -> vector<16x1xf32>
    %301 = arith.mulf %299, %300 : vector<16x1xf32>
    %cst_116 = arith.constant 2.000000e+00 : f32
    %302 = vector.broadcast %cst_116 : f32 to vector<16x1xf32>
    %303 = arith.subf %302, %301 : vector<16x1xf32>
    %304 = arith.mulf %300, %303 : vector<16x1xf32>
    %305 = vector.broadcast %304 : vector<16x1xf32> to vector<16x16xf32>
    %306 = arith.mulf %297, %305 : vector<16x16xf32>
    %307 = vector.extract_strided_slice %275 {offsets = [0, 0], sizes = [16, 8], strides = [1, 1]} : vector<32x8xf32> to vector<16x8xf32>
    %cst_117 = arith.constant dense<0.000000e+00> : vector<16x8xf32>
    %308 = tpu.matmul %306, %307, %cst_117 {dimension_numbers = #tpu.dot_dimension_numbers<[1], [0], [0], [1], [0, 0, 1, 1], [], []>} : vector<16x16xf32>, vector<16x8xf32>, vector<16x8xf32> -> vector<16x8xf32>
    %cst_118 = arith.constant 0.000000e+00 : f32
    %309 = vector.broadcast %cst_118 : f32 to vector<16x8xf32>
    %310 = arith.cmpf ogt, %308, %309 : vector<16x8xf32>
    %cst_119 = arith.constant 0.000000e+00 : f32
    %311 = vector.broadcast %cst_119 : f32 to vector<16x8xf32>
    %312 = arith.minimumf %308, %311 : vector<16x8xf32>
    %313 = math.exp %312 : vector<16x8xf32>
    %cst_120 = arith.constant 1.000000e+00 : f32
    %314 = vector.broadcast %cst_120 : f32 to vector<16x8xf32>
    %315 = arith.subf %313, %314 : vector<16x8xf32>
    %316 = arith.select %310, %308, %315 : vector<16x8xi1>, vector<16x8xf32>
    %cst_121 = arith.constant dense<0xFF800000> : vector<8xf32>
    %317 = vector.multi_reduction <maximumf>, %316, %cst_121 [0] : vector<16x8xf32> to vector<8xf32>
    %318 = vector.shape_cast %317 : vector<8xf32> to vector<1x8xf32>
    %319 = vector.extract_strided_slice %4 {offsets = [16, 3], sizes = [16, 1], strides = [1, 1]} : vector<32x4xf32> to vector<16x1xf32>
    %320 = vector.extract_strided_slice %6 {offsets = [3, 16], sizes = [1, 16], strides = [1, 1]} : vector<4x32xf32> to vector<1x16xf32>
    %321 = vector.broadcast %319 : vector<16x1xf32> to vector<16x16xf32>
    %322 = vector.broadcast %320 : vector<1x16xf32> to vector<16x16xf32>
    %323 = arith.addf %321, %322 : vector<16x16xf32>
    %cst_122 = arith.constant 0.000000e+00 : f32
    %324 = vector.broadcast %cst_122 : f32 to vector<16x16xf32>
    %325 = arith.cmpf ogt, %323, %324 : vector<16x16xf32>
    %cst_123 = arith.constant 2.000000e-01 : f32
    %326 = vector.broadcast %cst_123 : f32 to vector<16x16xf32>
    %327 = arith.mulf %326, %323 : vector<16x16xf32>
    %328 = arith.select %325, %323, %327 : vector<16x16xi1>, vector<16x16xf32>
    %c1_124 = arith.constant 1 : index
    %c0_125 = arith.constant 0 : index
    %c0_126 = arith.constant 0 : index
    %329 = vector.load %arg2[%c1_124, %c0_125, %c0_126] : memref<2x16x16xf32, #tpu.memory_space<vmem>>, vector<1x16x16xf32>
    %330 = vector.shape_cast %329 : vector<1x16x16xf32> to vector<16x16xf32>
    %cst_127 = arith.constant 0.000000e+00 : f32
    %331 = vector.broadcast %cst_127 : f32 to vector<16x16xf32>
    %332 = arith.cmpf ogt, %330, %331 : vector<16x16xf32>
    %cst_128 = arith.constant -9.000000e+15 : f32
    %333 = vector.broadcast %cst_128 : f32 to vector<16x16xf32>
    %334 = arith.select %332, %328, %333 : vector<16x16xi1>, vector<16x16xf32>
    %cst_129 = arith.constant dense<0xFF800000> : vector<16xf32>
    %335 = vector.multi_reduction <maximumf>, %334, %cst_129 [1] : vector<16x16xf32> to vector<16xf32>
    %336 = vector.shape_cast %335 : vector<16xf32> to vector<16x1xf32>
    %337 = vector.broadcast %336 : vector<16x1xf32> to vector<16x16xf32>
    %338 = arith.subf %334, %337 : vector<16x16xf32>
    %339 = math.exp %338 : vector<16x16xf32>
    %cst_130 = arith.constant dense<0.000000e+00> : vector<16xf32>
    %340 = vector.multi_reduction <add>, %339, %cst_130 [1] : vector<16x16xf32> to vector<16xf32>
    %341 = vector.shape_cast %340 : vector<16xf32> to vector<16x1xf32>
    %342 = tpu.reciprocal %341 {approx = true} : vector<16x1xf32> -> vector<16x1xf32>
    %343 = arith.mulf %341, %342 : vector<16x1xf32>
    %cst_131 = arith.constant 2.000000e+00 : f32
    %344 = vector.broadcast %cst_131 : f32 to vector<16x1xf32>
    %345 = arith.subf %344, %343 : vector<16x1xf32>
    %346 = arith.mulf %342, %345 : vector<16x1xf32>
    %347 = vector.broadcast %346 : vector<16x1xf32> to vector<16x16xf32>
    %348 = arith.mulf %339, %347 : vector<16x16xf32>
    %349 = vector.extract_strided_slice %275 {offsets = [16, 0], sizes = [16, 8], strides = [1, 1]} : vector<32x8xf32> to vector<16x8xf32>
    %cst_132 = arith.constant dense<0.000000e+00> : vector<16x8xf32>
    %350 = tpu.matmul %348, %349, %cst_132 {dimension_numbers = #tpu.dot_dimension_numbers<[1], [0], [0], [1], [0, 0, 1, 1], [], []>} : vector<16x16xf32>, vector<16x8xf32>, vector<16x8xf32> -> vector<16x8xf32>
    %cst_133 = arith.constant 0.000000e+00 : f32
    %351 = vector.broadcast %cst_133 : f32 to vector<16x8xf32>
    %352 = arith.cmpf ogt, %350, %351 : vector<16x8xf32>
    %cst_134 = arith.constant 0.000000e+00 : f32
    %353 = vector.broadcast %cst_134 : f32 to vector<16x8xf32>
    %354 = arith.minimumf %350, %353 : vector<16x8xf32>
    %355 = math.exp %354 : vector<16x8xf32>
    %cst_135 = arith.constant 1.000000e+00 : f32
    %356 = vector.broadcast %cst_135 : f32 to vector<16x8xf32>
    %357 = arith.subf %355, %356 : vector<16x8xf32>
    %358 = arith.select %352, %350, %357 : vector<16x8xi1>, vector<16x8xf32>
    %cst_136 = arith.constant dense<0xFF800000> : vector<8xf32>
    %359 = vector.multi_reduction <maximumf>, %358, %cst_136 [0] : vector<16x8xf32> to vector<8xf32>
    %360 = vector.shape_cast %359 : vector<8xf32> to vector<1x8xf32>
    %361 = tpu.concatenate %318, %360 in 0 : vector<1x8xf32>, vector<1x8xf32> -> vector<2x8xf32>
    %cst_137 = arith.constant dense<0.000000e+00> : vector<2x4xf32>
    %362 = tpu.matmul %361, %276, %cst_137 {dimension_numbers = #tpu.dot_dimension_numbers<[1], [0], [0], [1], [0, 0, 1, 1], [], []>} : vector<2x8xf32>, vector<8x4xf32>, vector<2x4xf32> -> vector<2x4xf32>
    %363 = arith.addf %274, %362 : vector<2x4xf32>
    %c0_138 = arith.constant 0 : index
    %c0_139 = arith.constant 0 : index
    %364 = vector.load %arg7[%c0_138, %c0_139] : memref<2x4xf32, #tpu.memory_space<vmem>>, vector<2x4xf32>
    tpu.vector_store %arg7[%c0_138, %c0_139], %363 {strides = array<i32>} : memref<2x4xf32, #tpu.memory_space<vmem>>, vector<2x4xf32>,
    return
  }
  func.func @transform_0(%arg0: i32) -> (i32, i32) {
    %c0_i32 = arith.constant 0 : i32
    %c0_i32_0 = arith.constant 0 : i32
    return %arg0, %c0_i32 : i32, i32
  }
  func.func @transform_1(%arg0: i32) -> (i32, i32, i32) {
    %c0_i32 = arith.constant 0 : i32
    %c0_i32_0 = arith.constant 0 : i32
    %c0_i32_1 = arith.constant 0 : i32
    return %arg0, %c0_i32, %c0_i32_0 : i32, i32, i32
  }
  func.func @transform_2(%arg0: i32) -> (i32, i32) {
    %c0_i32 = arith.constant 0 : i32
    %c0_i32_0 = arith.constant 0 : i32
    %c0_i32_1 = arith.constant 0 : i32
    return %c0_i32, %c0_i32_0 : i32, i32
  }
  func.func @transform_3(%arg0: i32) -> (i32, i32) {
    %c0_i32 = arith.constant 0 : i32
    %c0_i32_0 = arith.constant 0 : i32
    %c0_i32_1 = arith.constant 0 : i32
    return %c0_i32, %c0_i32_0 : i32, i32
  }
  func.func @transform_4(%arg0: i32) -> (i32, i32) {
    %c0_i32 = arith.constant 0 : i32
    %c0_i32_0 = arith.constant 0 : i32
    %c0_i32_1 = arith.constant 0 : i32
    return %c0_i32, %c0_i32_0 : i32, i32
  }
  func.func @transform_5(%arg0: i32) -> (i32, i32) {
    %c0_i32 = arith.constant 0 : i32
    %c0_i32_0 = arith.constant 0 : i32
    %c0_i32_1 = arith.constant 0 : i32
    return %c0_i32, %c0_i32_0 : i32, i32
  }
  func.func @transform_6(%arg0: i32) -> (i32, i32) {
    %c0_i32 = arith.constant 0 : i32
    %c0_i32_0 = arith.constant 0 : i32
    return %arg0, %c0_i32 : i32, i32
  }
}

</mosaic_0001>

<llo_original>
// kernel: gat_forward.1
$region0: #{gat_forward.1}
  #allocation0 [shape = 'u32[]', space=smem, size = 0x4, offset = 0x4, fixed_abs, tag = 'smem constant byte address 0x4 - core index']
  #allocation1 [shape = 'u32[144,128]{1,0:T(1,128)}', space=vmem, size = 0x12000, scoped, tag = 'internal scratch']
  %s0 = inlined_call_operand.vmem [shape: f32[32,8], index: 0, kind: input, shape index: {}]
  %s1 = inlined_call_operand.vmem [shape: f32[2,16,16], index: 1, kind: input, shape index: {}]
  %s2 = inlined_call_operand.vmem [shape: f32[8,32], index: 2, kind: input, shape index: {}]
  %s3 = inlined_call_operand.vmem [shape: f32[4,32], index: 3, kind: input, shape index: {}]
  %s4 = inlined_call_operand.vmem [shape: f32[4,32], index: 4, kind: input, shape index: {}]
  %s5 = inlined_call_operand.vmem [shape: f32[32,4], index: 5, kind: input, shape index: {}]
  %s6 = inlined_call_operand.hbm [shape: f32[2,4], index: 6, kind: output, shape index: {}]
  %s7 = sld [smem:[#allocation0]]
  $region34: #{gat_forward.1} parent=0
    _
  %s9 = ssub.s32 1, %s7
  %s10 = scalar_select 0, %s9, %s7
  $region1: #{gat_forward.1} parent=0
    #allocation2 [shape = 'u8[1024]{0}', space=vmem, size = 0x400, scoped, tag = 'output window, operand 0, single buffered']
    #allocation3 [shape = 's32[1]{0}', space=sflag, size = 0x4, scoped, tag = 'scoped memory for gat_forward.1']
    %11 = vsyncpa [#allocation3], 0
    // Predicated region
    $region2: #{gat_forward.1} parent=1 // pred_check
      _
    $region3: #{gat_forward.1} parent=1 // pred_check_branch
      %13 = sbr.rel (0) target = $region5
    $region4: #{gat_forward.1} parent=1 // pred_region
      _
    $region5: #{gat_forward.1} parent=1 // pred_fallthru
      _
    // Predicated region
    $region6: #{gat_forward.1} parent=1 // pred_check
      _
    $region7: #{gat_forward.1} parent=1 // pred_check_branch
      %15 = sbr.rel (0) target = $region9
    $region8: #{gat_forward.1} parent=1 // pred_region
      _
    $region9: #{gat_forward.1} parent=1 // pred_fallthru
      _
    // Predicated region
    $region10: #{gat_forward.1} parent=1 // pred_check
      _
    $region11: #{gat_forward.1} parent=1 // pred_check_branch
      %17 = sbr.rel (0) target = $region13
    $region12: #{gat_forward.1} parent=1 // pred_region
      _
    $region13: #{gat_forward.1} parent=1 // pred_fallthru
      _
    // Predicated region
    $region14: #{gat_forward.1} parent=1 // pred_check
      _
    $region15: #{gat_forward.1} parent=1 // pred_check_branch
      %19 = sbr.rel (0) target = $region17
    $region16: #{gat_forward.1} parent=1 // pred_region
      _
    $region17: #{gat_forward.1} parent=1 // pred_fallthru
      _
    // Predicated region
    $region18: #{gat_forward.1} parent=1 // pred_check
      _
    $region19: #{gat_forward.1} parent=1 // pred_check_branch
      %21 = sbr.rel (0) target = $region21
    $region20: #{gat_forward.1} parent=1 // pred_region
      _
    $region21: #{gat_forward.1} parent=1 // pred_fallthru
      _
    // Predicated region
    $region22: #{gat_forward.1} parent=1 // pred_check
      _
    $region23: #{gat_forward.1} parent=1 // pred_check_branch
      %23 = sbr.rel (0) target = $region25
    $region24: #{gat_forward.1} parent=1 // pred_region
      _
    $region25: #{gat_forward.1} parent=1 // pred_fallthru
      _
    %v24 = vld [vmem:[%s0] sm:$0xff]
    %v25 = vld [vmem:[%s0 + $0x8] sm:$0xff]
    %v26 = vld [vmem:[%s0 + $0x10] sm:$0xff]
    %v27 = vld [vmem:[%s0 + $0x18] sm:$0xff]
    %v28 = vld [vmem:[%s2] sm:$0xff]
    %vm29 = vcmask 64512
    %v31 = vsel %vm29, %v24, 0
    %v34 = vsel %vm29, %v25, 0
    %v37 = vsel %vm29, %v26, 0
    %v40 = vsel %vm29, %v27, 0
    %42 = vmatprep.subr.mxu0 0.0
    %43 = vmatpush1.msra.mxu0 %v28
    %44 = vmatprep.subr.mxu0 0.0
    %45 = vmatpush1.msra.mxu0 0.0
    %46 = vmatprep.subr.mxu0 0.0
    %47 = vmatpush1.msra.mxu0 0.0
    %48 = vmatprep.subr.mxu0 0.0
    %49 = vmatpush1.msra.mxu0 0.0
    %50 = vmatprep.subr.mxu0 0.0
    %51 = vmatpush1.msra.mxu0 0.0
    %52 = vmatprep.subr.mxu0 0.0
    %53 = vmatpush1.msra.mxu0 0.0
    %54 = vmatprep.subr.mxu0 0.0
    %55 = vmatpush1.msra.mxu0 0.0
    %56 = vmatprep.subr.mxu0 0.0
    %57 = vmatpush1.msra.mxu0 0.0
    %58 = vmatprep.subr.mxu0 0.0
    %59 = vmatpush1.msra.mxu0 0.0
    %60 = vmatprep.subr.mxu0 0.0
    %61 = vmatpush1.msra.mxu0 0.0
    %62 = vmatprep.subr.mxu0 0.0
    %63 = vmatpush1.msra.mxu0 0.0
    %64 = vmatprep.subr.mxu0 0.0
    %65 = vmatpush1.msra.mxu0 0.0
    %66 = vmatprep.subr.mxu0 0.0
    %67 = vmatpush1.msra.mxu0 0.0
    %68 = vmatprep.subr.mxu0 0.0
    %69 = vmatpush1.msra.mxu0 0.0
    %70 = vmatprep.subr.mxu0 0.0
    %71 = vmatpush1.msra.mxu0 0.0
    %72 = vmatprep.subr.mxu0 0.0
    %73 = vmatpush1.msra.mxu0 0.0
    %74 = vmatprep.subr.mxu0 0.0
    %75 = vmatpush1.msra.mxu0 0.0
    %76 = vmatprep.subr.mxu0 0.0
    %77 = vmatpush1.msra.mxu0 0.0
    %78 = vmatprep.subr.mxu0 0.0
    %79 = vmatpush1.msra.mxu0 0.0
    %80 = vmatprep.subr.mxu0 0.0
    %81 = vmatpush1.msra.mxu0 0.0
    %82 = vmatprep.subr.mxu0 0.0
    %83 = vmatpush1.msra.mxu0 0.0
    %84 = vmatprep.subr.mxu0 0.0
    %85 = vmatpush1.msra.mxu0 0.0
    %86 = vmatprep.subr.mxu0 0.0
    %87 = vmatpush1.msra.mxu0 0.0
    %88 = vmatprep.subr.mxu0 0.0
    %89 = vmatpush1.msra.mxu0 0.0
    %90 = vmatprep.subr.mxu0 0.0
    %91 = vmatpush1.msra.mxu0 0.0
    %92 = vmatprep.subr.mxu0 0.0
    %93 = vmatpush1.msra.mxu0 0.0
    %94 = vmatprep.subr.mxu0 0.0
    %95 = vmatpush1.msra.mxu0 0.0
    %96 = vmatprep.subr.mxu0 0.0
    %97 = vmatpush1.msra.mxu0 0.0
    %98 = vmatprep.subr.mxu0 0.0
    %99 = vmatpush1.msra.mxu0 0.0
    %100 = vmatprep.subr.mxu0 0.0
    %101 = vmatpush1.msra.mxu0 0.0
    %102 = vmatprep.subr.mxu0 0.0
    %103 = vmatpush1.msra.mxu0 0.0
    %104 = vmatprep.subr.mxu0 0.0
    %105 = vmatpush1.msra.mxu0 0.0
    %106 = vmatprep.mubr.f32.mxu0 0.0
    %107 = vmatmul.mubr.f32.gmra.mrb[0].mxu0 %v31
    %v108 = vpop.f32.mrb[0].mxu0
    %v109 = vadd.f32 0.0, %v108
    %v110 = vpop.f32.mrb[0].mxu0
    %111 = vmatprep.mubr.f32.mxu0 0.0
    %112 = vmatmul.mubr.f32.gmra.mrb[0].mxu0 %v34
    %v113 = vpop.f32.mrb[0].mxu0
    %v114 = vadd.f32 0.0, %v113
    %v115 = vpop.f32.mrb[0].mxu0
    %116 = vmatprep.mubr.f32.mxu0 0.0
    %117 = vmatmul.mubr.f32.gmra.mrb[0].mxu0 %v37
    %v118 = vpop.f32.mrb[0].mxu0
    %v119 = vadd.f32 0.0, %v118
    %v120 = vpop.f32.mrb[0].mxu0
    %121 = vmatprep.mubr.f32.mxu0 0.0
    %122 = vmatmul.mubr.f32.gmra.mrb[0].mxu0 %v40
    %v123 = vpop.f32.mrb[0].mxu0
    %v124 = vadd.f32 0.0, %v123
    %v125 = vpop.f32.mrb[0].mxu0
    %126 = vdwg.mxu0
    %v127 = vld [vmem:[%s3] sm:$0xf]
    %vm128 = vcmask 261120
    %v130 = vsel %vm128, %v109, 0
    %v133 = vsel %vm128, %v114, 0
    %v136 = vsel %vm128, %v119, 0
    %v139 = vsel %vm128, %v124, 0
    %v142 = vsel %vm128, %v127, 0
    %144 = vmatprep.subr.mxu0 0.0
    %145 = vmatpush1.xpose.msra.mxu0 %v142
    %146 = vmatprep.subr.mxu0 0.0
    %147 = vmatpush1.xpose.msra.mxu0 0.0
    %148 = vmatprep.subr.mxu0 0.0
    %149 = vmatpush1.xpose.msra.mxu0 0.0
    %150 = vmatprep.subr.mxu0 0.0
    %151 = vmatpush1.xpose.msra.mxu0 0.0
    %152 = vmatprep.subr.mxu0 0.0
    %153 = vmatpush1.xpose.msra.mxu0 0.0
    %154 = vmatprep.subr.mxu0 0.0
    %155 = vmatpush1.xpose.msra.mxu0 0.0
    %156 = vmatprep.subr.mxu0 0.0
    %157 = vmatpush1.xpose.msra.mxu0 0.0
    %158 = vmatprep.subr.mxu0 0.0
    %159 = vmatpush1.xpose.msra.mxu0 0.0
    %160 = vmatprep.subr.mxu0 0.0
    %161 = vmatpush1.xpose.msra.mxu0 0.0
    %162 = vmatprep.subr.mxu0 0.0
    %163 = vmatpush1.xpose.msra.mxu0 0.0
    %164 = vmatprep.subr.mxu0 0.0
    %165 = vmatpush1.xpose.msra.mxu0 0.0
    %166 = vmatprep.subr.mxu0 0.0
    %167 = vmatpush1.xpose.msra.mxu0 0.0
    %168 = vmatprep.subr.mxu0 0.0
    %169 = vmatpush1.xpose.msra.mxu0 0.0
    %170 = vmatprep.subr.mxu0 0.0
    %171 = vmatpush1.xpose.msra.mxu0 0.0
    %172 = vmatprep.subr.mxu0 0.0
    %173 = vmatpush1.xpose.msra.mxu0 0.0
    %174 = vmatprep.subr.mxu0 0.0
    %175 = vmatpush1.xpose.msra.mxu0 0.0
    %176 = vmatprep.subr.mxu0 0.0
    %177 = vmatpush1.xpose.msra.mxu0 0.0
    %178 = vmatprep.subr.mxu0 0.0
    %179 = vmatpush1.xpose.msra.mxu0 0.0
    %180 = vmatprep.subr.mxu0 0.0
    %181 = vmatpush1.xpose.msra.mxu0 0.0
    %182 = vmatprep.subr.mxu0 0.0
    %183 = vmatpush1.xpose.msra.mxu0 0.0
    %184 = vmatprep.subr.mxu0 0.0
    %185 = vmatpush1.xpose.msra.mxu0 0.0
    %186 = vmatprep.subr.mxu0 0.0
    %187 = vmatpush1.xpose.msra.mxu0 0.0
    %188 = vmatprep.subr.mxu0 0.0
    %189 = vmatpush1.xpose.msra.mxu0 0.0
    %190 = vmatprep.subr.mxu0 0.0
    %191 = vmatpush1.xpose.msra.mxu0 0.0
    %192 = vmatprep.subr.mxu0 0.0
    %193 = vmatpush1.xpose.msra.mxu0 0.0
    %194 = vmatprep.subr.mxu0 0.0
    %195 = vmatpush1.xpose.msra.mxu0 0.0
    %196 = vmatprep.subr.mxu0 0.0
    %197 = vmatpush1.xpose.msra.mxu0 0.0
    %198 = vmatprep.subr.mxu0 0.0
    %199 = vmatpush1.xpose.msra.mxu0 0.0
    %200 = vmatprep.subr.mxu0 0.0
    %201 = vmatpush1.xpose.msra.mxu0 0.0
    %202 = vmatprep.subr.mxu0 0.0
    %203 = vmatpush1.xpose.msra.mxu0 0.0
    %204 = vmatprep.subr.mxu0 0.0
    %205 = vmatpush1.xpose.msra.mxu0 0.0
    %206 = vmatprep.subr.mxu0 0.0
    %207 = vmatpush1.xpose.msra.mxu0 0.0
    %208 = vmatprep.mubr.f32.mxu0 0.0
    %209 = vmatmul.mubr.f32.gmra.mrb[0].mxu0 %v130
    %v210 = vpop.f32.mrb[0].mxu0
    %v211 = vadd.f32 0.0, %v210
    %v212 = vpop.f32.mrb[0].mxu0
    %213 = vmatprep.mubr.f32.mxu0 0.0
    %214 = vmatmul.mubr.f32.gmra.mrb[0].mxu0 %v133
    %v215 = vpop.f32.mrb[0].mxu0
    %v216 = vadd.f32 0.0, %v215
    %v217 = vpop.f32.mrb[0].mxu0
    %218 = vmatprep.mubr.f32.mxu0 0.0
    %219 = vmatmul.mubr.f32.gmra.mrb[0].mxu0 %v136
    %v220 = vpop.f32.mrb[0].mxu0
    %v221 = vadd.f32 0.0, %v220
    %v222 = vpop.f32.mrb[0].mxu0
    %223 = vmatprep.mubr.f32.mxu0 0.0
    %224 = vmatmul.mubr.f32.gmra.mrb[0].mxu0 %v139
    %v225 = vpop.f32.mrb[0].mxu0
    %v226 = vadd.f32 0.0, %v225
    %v227 = vpop.f32.mrb[0].mxu0
    %228 = vdwg.mxu0
    %v229 = vld [vmem:[%s4] sm:$0xf]
    %v231 = vsel %vm128, %v229, 0
    %233 = vmatprep.subr.mxu0 0.0
    %234 = vmatpush1.xpose.msra.mxu0 %v130
    %235 = vmatprep.subr.mxu0 0.0
    %236 = vmatpush1.xpose.msra.mxu0 %v133
    %237 = vmatprep.subr.mxu0 0.0
    %238 = vmatpush1.xpose.msra.mxu0 %v136
    %239 = vmatprep.subr.mxu0 0.0
    %240 = vmatpush1.xpose.msra.mxu0 %v139
    %241 = vmatprep.subr.mxu0 0.0
    %242 = vmatpush1.xpose.msra.mxu0 0.0
    %243 = vmatprep.subr.mxu0 0.0
    %244 = vmatpush1.xpose.msra.mxu0 0.0
    %245 = vmatprep.subr.mxu0 0.0
    %246 = vmatpush1.xpose.msra.mxu0 0.0
    %247 = vmatprep.subr.mxu0 0.0
    %248 = vmatpush1.xpose.msra.mxu0 0.0
    %249 = vmatprep.subr.mxu0 0.0
    %250 = vmatpush1.xpose.msra.mxu0 0.0
    %251 = vmatprep.subr.mxu0 0.0
    %252 = vmatpush1.xpose.msra.mxu0 0.0
    %253 = vmatprep.subr.mxu0 0.0
    %254 = vmatpush1.xpose.msra.mxu0 0.0
    %255 = vmatprep.subr.mxu0 0.0
    %256 = vmatpush1.xpose.msra.mxu0 0.0
    %257 = vmatprep.subr.mxu0 0.0
    %258 = vmatpush1.xpose.msra.mxu0 0.0
    %259 = vmatprep.subr.mxu0 0.0
    %260 = vmatpush1.xpose.msra.mxu0 0.0
    %261 = vmatprep.subr.mxu0 0.0
    %262 = vmatpush1.xpose.msra.mxu0 0.0
    %263 = vmatprep.subr.mxu0 0.0
    %264 = vmatpush1.xpose.msra.mxu0 0.0
    %265 = vmatprep.subr.mxu0 0.0
    %266 = vmatpush1.xpose.msra.mxu0 0.0
    %267 = vmatprep.subr.mxu0 0.0
    %268 = vmatpush1.xpose.msra.mxu0 0.0
    %269 = vmatprep.subr.mxu0 0.0
    %270 = vmatpush1.xpose.msra.mxu0 0.0
    %271 = vmatprep.subr.mxu0 0.0
    %272 = vmatpush1.xpose.msra.mxu0 0.0
    %273 = vmatprep.subr.mxu0 0.0
    %274 = vmatpush1.xpose.msra.mxu0 0.0
    %275 = vmatprep.subr.mxu0 0.0
    %276 = vmatpush1.xpose.msra.mxu0 0.0
    %277 = vmatprep.subr.mxu0 0.0
    %278 = vmatpush1.xpose.msra.mxu0 0.0
    %279 = vmatprep.subr.mxu0 0.0
    %280 = vmatpush1.xpose.msra.mxu0 0.0
    %281 = vmatprep.subr.mxu0 0.0
    %282 = vmatpush1.xpose.msra.mxu0 0.0
    %283 = vmatprep.subr.mxu0 0.0
    %284 = vmatpush1.xpose.msra.mxu0 0.0
    %285 = vmatprep.subr.mxu0 0.0
    %286 = vmatpush1.xpose.msra.mxu0 0.0
    %287 = vmatprep.subr.mxu0 0.0
    %288 = vmatpush1.xpose.msra.mxu0 0.0
    %289 = vmatprep.subr.mxu0 0.0
    %290 = vmatpush1.xpose.msra.mxu0 0.0
    %291 = vmatprep.subr.mxu0 0.0
    %292 = vmatpush1.xpose.msra.mxu0 0.0
    %293 = vmatprep.subr.mxu0 0.0
    %294 = vmatpush1.xpose.msra.mxu0 0.0
    %295 = vmatprep.subr.mxu0 0.0
    %296 = vmatpush1.xpose.msra.mxu0 0.0
    %297 = vmatprep.mubr.f32.mxu0 0.0
    %298 = vmatmul.mubr.f32.gmra.mrb[0].mxu0 %v231
    %v299 = vpop.f32.mrb[0].mxu0
    %v300 = vadd.f32 0.0, %v299
    %v301 = vpop.f32.mrb[0].mxu0
    %302 = vdwg.mxu0
    %v303 = vld [vmem:[%s5] sm:$0xff]
    %305 = vset.pattern.permute.xlu0 0
    %306 = vperm.xlu0 %305, %v211
    %v307 = vpop.permute.xlu0 %306
    %310 = vset.pattern.permute.xlu0 0
    %311 = vperm.xlu0 %310, %v216
    %v312 = vpop.permute.xlu0 %311
    %v314 = vlaneseq
    %v315 = vshrl.u32 %v314, 7
    %v316 = vsub.s32 0, %v315
    %v317 = vrot.slane %v300, %v316
    %v318 = vadd.f32 %v307, %v317
    %v319 = vadd.f32 %v312, %v317
    %vm320 = vcmp.gt.f32.partialorder %v318, 0.0
    %vm321 = vcmp.gt.f32.partialorder %v319, 0.0
    %v322 = vmul.f32 %v318, 0.2
    %v323 = vmul.f32 %v319, 0.2
    %v324 = vsel %vm320, %v318, %v322
    %v325 = vsel %vm321, %v319, %v323
    %v326 = vld [vmem:[%s1] sm:$0xff]
    %v327 = vld [vmem:[%s1 + $0x8] sm:$0xff]
    %vm328 = vcmp.gt.f32.partialorder %v326, 0.0
    %vm329 = vcmp.gt.f32.partialorder %v327, 0.0
    %v330 = vsel %vm328, %v324, -9e+15
    %v331 = vsel %vm329, %v325, -9e+15
    %vm332 = vcmask 130048
    %v333 = vsel %vm332, %v330, -inf
    %334 = vmax.xlane.f32.xlu0 %v333
    %v335 = vpop.xlane.xlu0 %334
    %v336 = vsel %vm332, %v331, -inf
    %337 = vmax.xlane.f32.xlu0 %v336
    %v338 = vpop.xlane.xlu0 %337
    %v339 = vsub.f32 %v330, %v335
    %v340 = vsub.f32 %v331, %v338
    %v341 = vmul.f32 %v339, 1.442695
    %v342 = vpow.pop %v341
    %v343 = vmul.f32 %v340, 1.442695
    %v344 = vpow.pop %v343
    %v345 = vsel %vm332, %v342, 0.0
    %346 = vadd.xlane.f32.xlu0 %v345
    %v347 = vpop.xlane.xlu0 %346
    %v348 = vsel %vm332, %v344, 0.0
    %349 = vadd.xlane.f32.xlu0 %v348
    %v350 = vpop.xlane.xlu0 %349
    %v351 = vrcp.pop %v347
    %v352 = vrcp.pop %v350
    %v353 = vmul.f32 %v347, %v351
    %v354 = vmul.f32 %v350, %v352
    %v355 = vsub.f32 2.0, %v353
    %v356 = vsub.f32 2.0, %v354
    %v357 = vmul.f32 %v351, %v355
    %v358 = vmul.f32 %v352, %v356
    %v359 = vmul.f32 %v342, %v357
    %v360 = vmul.f32 %v344, %v358
    %v362 = vsel %vm332, %v359, 0
    %v365 = vsel %vm332, %v360, 0
    %367 = vmatprep.subr.mxu0 0.0
    %368 = vmatpush1.msra.mxu0 %v109
    %369 = vmatprep.subr.mxu0 0.0
    %370 = vmatpush1.msra.mxu0 %v114
    %371 = vmatprep.subr.mxu0 0.0
    %372 = vmatpush1.msra.mxu0 0.0
    %373 = vmatprep.subr.mxu0 0.0
    %374 = vmatpush1.msra.mxu0 0.0
    %375 = vmatprep.subr.mxu0 0.0
    %376 = vmatpush1.msra.mxu0 0.0
    %377 = vmatprep.subr.mxu0 0.0
    %378 = vmatpush1.msra.mxu0 0.0
    %379 = vmatprep.subr.mxu0 0.0
    %380 = vmatpush1.msra.mxu0 0.0
    %381 = vmatprep.subr.mxu0 0.0
    %382 = vmatpush1.msra.mxu0 0.0
    %383 = vmatprep.subr.mxu0 0.0
    %384 = vmatpush1.msra.mxu0 0.0
    %385 = vmatprep.subr.mxu0 0.0
    %386 = vmatpush1.msra.mxu0 0.0
    %387 = vmatprep.subr.mxu0 0.0
    %388 = vmatpush1.msra.mxu0 0.0
    %389 = vmatprep.subr.mxu0 0.0
    %390 = vmatpush1.msra.mxu0 0.0
    %391 = vmatprep.subr.mxu0 0.0
    %392 = vmatpush1.msra.mxu0 0.0
    %393 = vmatprep.subr.mxu0 0.0
    %394 = vmatpush1.msra.mxu0 0.0
    %395 = vmatprep.subr.mxu0 0.0
    %396 = vmatpush1.msra.mxu0 0.0
    %397 = vmatprep.subr.mxu0 0.0
    %398 = vmatpush1.msra.mxu0 0.0
    %399 = vmatprep.subr.mxu0 0.0
    %400 = vmatpush1.msra.mxu0 0.0
    %401 = vmatprep.subr.mxu0 0.0
    %402 = vmatpush1.msra.mxu0 0.0
    %403 = vmatprep.subr.mxu0 0.0
    %404 = vmatpush1.msra.mxu0 0.0
    %405 = vmatprep.subr.mxu0 0.0
    %406 = vmatpush1.msra.mxu0 0.0
    %407 = vmatprep.subr.mxu0 0.0
    %408 = vmatpush1.msra.mxu0 0.0
    %409 = vmatprep.subr.mxu0 0.0
    %410 = vmatpush1.msra.mxu0 0.0
    %411 = vmatprep.subr.mxu0 0.0
    %412 = vmatpush1.msra.mxu0 0.0
    %413 = vmatprep.subr.mxu0 0.0
    %414 = vmatpush1.msra.mxu0 0.0
    %415 = vmatprep.subr.mxu0 0.0
    %416 = vmatpush1.msra.mxu0 0.0
    %417 = vmatprep.subr.mxu0 0.0
    %418 = vmatpush1.msra.mxu0 0.0
    %419 = vmatprep.subr.mxu0 0.0
    %420 = vmatpush1.msra.mxu0 0.0
    %421 = vmatprep.subr.mxu0 0.0
    %422 = vmatpush1.msra.mxu0 0.0
    %423 = vmatprep.subr.mxu0 0.0
    %424 = vmatpush1.msra.mxu0 0.0
    %425 = vmatprep.subr.mxu0 0.0
    %426 = vmatpush1.msra.mxu0 0.0
    %427 = vmatprep.subr.mxu0 0.0
    %428 = vmatpush1.msra.mxu0 0.0
    %429 = vmatprep.subr.mxu0 0.0
    %430 = vmatpush1.msra.mxu0 0.0
    %431 = vmatprep.mubr.f32.mxu0 0.0
    %432 = vmatmul.mubr.f32.gmra.mrb[0].mxu0 %v362
    %v433 = vpop.f32.mrb[0].mxu0
    %v434 = vadd.f32 0.0, %v433
    %v435 = vpop.f32.mrb[0].mxu0
    %436 = vmatprep.mubr.f32.mxu0 0.0
    %437 = vmatmul.mubr.f32.gmra.mrb[0].mxu0 %v365
    %v438 = vpop.f32.mrb[0].mxu0
    %v439 = vadd.f32 0.0, %v438
    %v440 = vpop.f32.mrb[0].mxu0
    %441 = vdwg.mxu0
    %vm442 = vcmp.gt.f32.partialorder %v434, 0.0
    %vm443 = vcmp.gt.f32.partialorder %v439, 0.0
    %v444 = vmin.f32 %v434, 0.0
    %v445 = vmin.f32 %v439, 0.0
    %v446 = vmul.f32 %v444, 1.442695
    %v447 = vpow.pop %v446
    %v448 = vmul.f32 %v445, 1.442695
    %v449 = vpow.pop %v448
    %v450 = vsub.f32 %v447, 1.0
    %v451 = vsub.f32 %v449, 1.0
    %v452 = vsel %vm442, %v434, %v450
    %v453 = vsel %vm443, %v439, %v451
    %v454 = vsel %vm29, %v452, -inf
    %v455 = vsel %vm29, %v453, -inf
    %v456 = vmax.f32 %v454, %v455
    %v457 = vrot.slane %v456, 4
    %v458 = vmax.f32 %v456, %v457
    %v459 = vrot.slane %v458, 2
    %v460 = vmax.f32 %v458, %v459
    %v461 = vrot.slane %v460, 1
    %v462 = vmax.f32 %v460, %v461
    %464 = vset.pattern.permute.xlu0 0
    %465 = vperm.xlu0 %464, %v221
    %v466 = vpop.permute.xlu0 %465
    %469 = vset.pattern.permute.xlu0 0
    %470 = vperm.xlu0 %469, %v226
    %v471 = vpop.permute.xlu0 %470
    %v473 = vadd.f32 %v466, %v317
    %v474 = vadd.f32 %v471, %v317
    %vm475 = vcmp.gt.f32.partialorder %v473, 0.0
    %vm476 = vcmp.gt.f32.partialorder %v474, 0.0
    %v477 = vmul.f32 %v473, 0.2
    %v478 = vmul.f32 %v474, 0.2
    %v479 = vsel %vm475, %v473, %v477
    %v480 = vsel %vm476, %v474, %v478
    %s481 = scalar_lea.vmem %s1, 16
    %v482 = vld [vmem:[%s481] sm:$0xff]
    %v483 = vld [vmem:[%s481 + $0x8] sm:$0xff]
    %vm484 = vcmp.gt.f32.partialorder %v482, 0.0
    %vm485 = vcmp.gt.f32.partialorder %v483, 0.0
    %488 = vrot.lane.b32.xlu0 %v479, 112
    %v489 = vpop.permute.xlu0 %488
    %490 = vrot.lane.b32.xlu0 %v480, 112
    %v491 = vpop.permute.xlu0 %490
    %v494 = vsel %vm484, %v489, -9e+15
    %v495 = vsel %vm485, %v491, -9e+15
    %v496 = vsel %vm332, %v494, -inf
    %497 = vmax.xlane.f32.xlu0 %v496
    %v498 = vpop.xlane.xlu0 %497
    %v499 = vsel %vm332, %v495, -inf
    %500 = vmax.xlane.f32.xlu0 %v499
    %v501 = vpop.xlane.xlu0 %500
    %v502 = vsub.f32 %v494, %v498
    %v503 = vsub.f32 %v495, %v501
    %v504 = vmul.f32 %v502, 1.442695
    %v505 = vpow.pop %v504
    %v506 = vmul.f32 %v503, 1.442695
    %v507 = vpow.pop %v506
    %v508 = vsel %vm332, %v505, 0.0
    %509 = vadd.xlane.f32.xlu0 %v508
    %v510 = vpop.xlane.xlu0 %509
    %v511 = vsel %vm332, %v507, 0.0
    %512 = vadd.xlane.f32.xlu0 %v511
    %v513 = vpop.xlane.xlu0 %512
    %v514 = vrcp.pop %v510
    %v515 = vrcp.pop %v513
    %v516 = vmul.f32 %v510, %v514
    %v517 = vmul.f32 %v513, %v515
    %v518 = vsub.f32 2.0, %v516
    %v519 = vsub.f32 2.0, %v517
    %v520 = vmul.f32 %v514, %v518
    %v521 = vmul.f32 %v515, %v519
    %v522 = vmul.f32 %v505, %v520
    %v523 = vmul.f32 %v507, %v521
    %v525 = vsel %vm332, %v522, 0
    %v528 = vsel %vm332, %v523, 0
    %530 = vmatprep.subr.mxu0 0.0
    %531 = vmatpush1.msra.mxu0 %v119
    %532 = vmatprep.subr.mxu0 0.0
    %533 = vmatpush1.msra.mxu0 %v124
    %534 = vmatprep.subr.mxu0 0.0
    %535 = vmatpush1.msra.mxu0 0.0
    %536 = vmatprep.subr.mxu0 0.0
    %537 = vmatpush1.msra.mxu0 0.0
    %538 = vmatprep.subr.mxu0 0.0
    %539 = vmatpush1.msra.mxu0 0.0
    %540 = vmatprep.subr.mxu0 0.0
    %541 = vmatpush1.msra.mxu0 0.0
    %542 = vmatprep.subr.mxu0 0.0
    %543 = vmatpush1.msra.mxu0 0.0
    %544 = vmatprep.subr.mxu0 0.0
    %545 = vmatpush1.msra.mxu0 0.0
    %546 = vmatprep.subr.mxu0 0.0
    %547 = vmatpush1.msra.mxu0 0.0
    %548 = vmatprep.subr.mxu0 0.0
    %549 = vmatpush1.msra.mxu0 0.0
    %550 = vmatprep.subr.mxu0 0.0
    %551 = vmatpush1.msra.mxu0 0.0
    %552 = vmatprep.subr.mxu0 0.0
    %553 = vmatpush1.msra.mxu0 0.0
    %554 = vmatprep.subr.mxu0 0.0
    %555 = vmatpush1.msra.mxu0 0.0
    %556 = vmatprep.subr.mxu0 0.0
    %557 = vmatpush1.msra.mxu0 0.0
    %558 = vmatprep.subr.mxu0 0.0
    %559 = vmatpush1.msra.mxu0 0.0
    %560 = vmatprep.subr.mxu0 0.0
    %561 = vmatpush1.msra.mxu0 0.0
    %562 = vmatprep.subr.mxu0 0.0
    %563 = vmatpush1.msra.mxu0 0.0
    %564 = vmatprep.subr.mxu0 0.0
    %565 = vmatpush1.msra.mxu0 0.0
    %566 = vmatprep.subr.mxu0 0.0
    %567 = vmatpush1.msra.mxu0 0.0
    %568 = vmatprep.subr.mxu0 0.0
    %569 = vmatpush1.msra.mxu0 0.0
    %570 = vmatprep.subr.mxu0 0.0
    %571 = vmatpush1.msra.mxu0 0.0
    %572 = vmatprep.subr.mxu0 0.0
    %573 = vmatpush1.msra.mxu0 0.0
    %574 = vmatprep.subr.mxu0 0.0
    %575 = vmatpush1.msra.mxu0 0.0
    %576 = vmatprep.subr.mxu0 0.0
    %577 = vmatpush1.msra.mxu0 0.0
    %578 = vmatprep.subr.mxu0 0.0
    %579 = vmatpush1.msra.mxu0 0.0
    %580 = vmatprep.subr.mxu0 0.0
    %581 = vmatpush1.msra.mxu0 0.0
    %582 = vmatprep.subr.mxu0 0.0
    %583 = vmatpush1.msra.mxu0 0.0
    %584 = vmatprep.subr.mxu0 0.0
    %585 = vmatpush1.msra.mxu0 0.0
    %586 = vmatprep.subr.mxu0 0.0
    %587 = vmatpush1.msra.mxu0 0.0
    %588 = vmatprep.subr.mxu0 0.0
    %589 = vmatpush1.msra.mxu0 0.0
    %590 = vmatprep.subr.mxu0 0.0
    %591 = vmatpush1.msra.mxu0 0.0
    %592 = vmatprep.subr.mxu0 0.0
    %593 = vmatpush1.msra.mxu0 0.0
    %594 = vmatprep.mubr.f32.mxu0 0.0
    %595 = vmatmul.mubr.f32.gmra.mrb[0].mxu0 %v525
    %v596 = vpop.f32.mrb[0].mxu0
    %v597 = vadd.f32 0.0, %v596
    %v598 = vpop.f32.mrb[0].mxu0
    %599 = vmatprep.mubr.f32.mxu0 0.0
    %600 = vmatmul.mubr.f32.gmra.mrb[0].mxu0 %v528
    %v601 = vpop.f32.mrb[0].mxu0
    %v602 = vadd.f32 0.0, %v601
    %v603 = vpop.f32.mrb[0].mxu0
    %604 = vdwg.mxu0
    %vm605 = vcmp.gt.f32.partialorder %v597, 0.0
    %vm606 = vcmp.gt.f32.partialorder %v602, 0.0
    %v607 = vmin.f32 %v597, 0.0
    %v608 = vmin.f32 %v602, 0.0
    %v609 = vmul.f32 %v607, 1.442695
    %v610 = vpow.pop %v609
    %v611 = vmul.f32 %v608, 1.442695
    %v612 = vpow.pop %v611
    %v613 = vsub.f32 %v610, 1.0
    %v614 = vsub.f32 %v612, 1.0
    %v615 = vsel %vm605, %v597, %v613
    %v616 = vsel %vm606, %v602, %v614
    %v617 = vsel %vm29, %v615, -inf
    %v618 = vsel %vm29, %v616, -inf
    %v619 = vmax.f32 %v617, %v618
    %v620 = vrot.slane %v619, 4
    %v621 = vmax.f32 %v619, %v620
    %v622 = vrot.slane %v621, 2
    %v623 = vmax.f32 %v621, %v622
    %v624 = vrot.slane %v623, 1
    %v625 = vmax.f32 %v623, %v624
    %vm626 = vcmask 1040384
    %v627 = vsel %vm626, %v462, %v625
    %v628 = vld [vmem:[%s5 + $0x8] sm:$0xff]
    %629 = vset.pattern.permute.xlu0 1
    %630 = vperm.xlu0 %629, %v211
    %v631 = vpop.permute.xlu0 %630
    %633 = vset.pattern.permute.xlu0 1
    %634 = vperm.xlu0 %633, %v216
    %v635 = vpop.permute.xlu0 %634
    %v637 = vlaneseq
    %v638 = vshrl.u32 %v637, 7
    %v639 = vsub.s32 1, %v638
    %v640 = vrot.slane %v300, %v639
    %v641 = vadd.f32 %v631, %v640
    %v642 = vadd.f32 %v635, %v640
    %vm643 = vcmp.gt.f32.partialorder %v641, 0.0
    %vm644 = vcmp.gt.f32.partialorder %v642, 0.0
    %v645 = vmul.f32 %v641, 0.2
    %v646 = vmul.f32 %v642, 0.2
    %v647 = vsel %vm643, %v641, %v645
    %v648 = vsel %vm644, %v642, %v646
    %v649 = vsel %vm328, %v647, -9e+15
    %v650 = vsel %vm329, %v648, -9e+15
    %v651 = vsel %vm332, %v649, -inf
    %652 = vmax.xlane.f32.xlu0 %v651
    %v653 = vpop.xlane.xlu0 %652
    %v654 = vsel %vm332, %v650, -inf
    %655 = vmax.xlane.f32.xlu0 %v654
    %v656 = vpop.xlane.xlu0 %655
    %v657 = vsub.f32 %v649, %v653
    %v658 = vsub.f32 %v650, %v656
    %v659 = vmul.f32 %v657, 1.442695
    %v660 = vpow.pop %v659
    %v661 = vmul.f32 %v658, 1.442695
    %v662 = vpow.pop %v661
    %v663 = vsel %vm332, %v660, 0.0
    %664 = vadd.xlane.f32.xlu0 %v663
    %v665 = vpop.xlane.xlu0 %664
    %v666 = vsel %vm332, %v662, 0.0
    %667 = vadd.xlane.f32.xlu0 %v666
    %v668 = vpop.xlane.xlu0 %667
    %v669 = vrcp.pop %v665
    %v670 = vrcp.pop %v668
    %v671 = vmul.f32 %v665, %v669
    %v672 = vmul.f32 %v668, %v670
    %v673 = vsub.f32 2.0, %v671
    %v674 = vsub.f32 2.0, %v672
    %v675 = vmul.f32 %v669, %v673
    %v676 = vmul.f32 %v670, %v674
    %v677 = vmul.f32 %v660, %v675
    %v678 = vmul.f32 %v662, %v676
    %679 = vrot.lane.b32.xlu0 %v109, 120
    %v680 = vpop.permute.xlu0 %679
    %681 = vrot.lane.b32.xlu0 %v114, 120
    %v682 = vpop.permute.xlu0 %681
    %v686 = vsel %vm332, %v677, 0
    %v689 = vsel %vm332, %v678, 0
    %691 = vmatprep.subr.mxu0 0.0
    %692 = vmatpush1.msra.mxu0 %v680
    %693 = vmatprep.subr.mxu0 0.0
    %694 = vmatpush1.msra.mxu0 %v682
    %695 = vmatprep.subr.mxu0 0.0
    %696 = vmatpush1.msra.mxu0 0.0
    %697 = vmatprep.subr.mxu0 0.0
    %698 = vmatpush1.msra.mxu0 0.0
    %699 = vmatprep.subr.mxu0 0.0
    %700 = vmatpush1.msra.mxu0 0.0
    %701 = vmatprep.subr.mxu0 0.0
    %702 = vmatpush1.msra.mxu0 0.0
    %703 = vmatprep.subr.mxu0 0.0
    %704 = vmatpush1.msra.mxu0 0.0
    %705 = vmatprep.subr.mxu0 0.0
    %706 = vmatpush1.msra.mxu0 0.0
    %707 = vmatprep.subr.mxu0 0.0
    %708 = vmatpush1.msra.mxu0 0.0
    %709 = vmatprep.subr.mxu0 0.0
    %710 = vmatpush1.msra.mxu0 0.0
    %711 = vmatprep.subr.mxu0 0.0
    %712 = vmatpush1.msra.mxu0 0.0
    %713 = vmatprep.subr.mxu0 0.0
    %714 = vmatpush1.msra.mxu0 0.0
    %715 = vmatprep.subr.mxu0 0.0
    %716 = vmatpush1.msra.mxu0 0.0
    %717 = vmatprep.subr.mxu0 0.0
    %718 = vmatpush1.msra.mxu0 0.0
    %719 = vmatprep.subr.mxu0 0.0
    %720 = vmatpush1.msra.mxu0 0.0
    %721 = vmatprep.subr.mxu0 0.0
    %722 = vmatpush1.msra.mxu0 0.0
    %723 = vmatprep.subr.mxu0 0.0
    %724 = vmatpush1.msra.mxu0 0.0
    %725 = vmatprep.subr.mxu0 0.0
    %726 = vmatpush1.msra.mxu0 0.0
    %727 = vmatprep.subr.mxu0 0.0
    %728 = vmatpush1.msra.mxu0 0.0
    %729 = vmatprep.subr.mxu0 0.0
    %730 = vmatpush1.msra.mxu0 0.0
    %731 = vmatprep.subr.mxu0 0.0
    %732 = vmatpush1.msra.mxu0 0.0
    %733 = vmatprep.subr.mxu0 0.0
    %734 = vmatpush1.msra.mxu0 0.0
    %735 = vmatprep.subr.mxu0 0.0
    %736 = vmatpush1.msra.mxu0 0.0
    %737 = vmatprep.subr.mxu0 0.0
    %738 = vmatpush1.msra.mxu0 0.0
    %739 = vmatprep.subr.mxu0 0.0
    %740 = vmatpush1.msra.mxu0 0.0
    %741 = vmatprep.subr.mxu0 0.0
    %742 = vmatpush1.msra.mxu0 0.0
    %743 = vmatprep.subr.mxu0 0.0
    %744 = vmatpush1.msra.mxu0 0.0
    %745 = vmatprep.subr.mxu0 0.0
    %746 = vmatpush1.msra.mxu0 0.0
    %747 = vmatprep.subr.mxu0 0.0
    %748 = vmatpush1.msra.mxu0 0.0
    %749 = vmatprep.subr.mxu0 0.0
    %750 = vmatpush1.msra.mxu0 0.0
    %751 = vmatprep.subr.mxu0 0.0
    %752 = vmatpush1.msra.mxu0 0.0
    %753 = vmatprep.subr.mxu0 0.0
    %754 = vmatpush1.msra.mxu0 0.0
    %755 = vmatprep.mubr.f32.mxu0 0.0
    %756 = vmatmul.mubr.f32.gmra.mrb[0].mxu0 %v686
    %v757 = vpop.f32.mrb[0].mxu0
    %v758 = vadd.f32 0.0, %v757
    %v759 = vpop.f32.mrb[0].mxu0
    %760 = vmatprep.mubr.f32.mxu0 0.0
    %761 = vmatmul.mubr.f32.gmra.mrb[0].mxu0 %v689
    %v762 = vpop.f32.mrb[0].mxu0
    %v763 = vadd.f32 0.0, %v762
    %v764 = vpop.f32.mrb[0].mxu0
    %765 = vdwg.mxu0
    %vm766 = vcmp.gt.f32.partialorder %v758, 0.0
    %vm767 = vcmp.gt.f32.partialorder %v763, 0.0
    %v768 = vmin.f32 %v758, 0.0
    %v769 = vmin.f32 %v763, 0.0
    %v770 = vmul.f32 %v768, 1.442695
    %v771 = vpow.pop %v770
    %v772 = vmul.f32 %v769, 1.442695
    %v773 = vpow.pop %v772
    %v774 = vsub.f32 %v771, 1.0
    %v775 = vsub.f32 %v773, 1.0
    %v776 = vsel %vm766, %v758, %v774
    %v777 = vsel %vm767, %v763, %v775
    %v778 = vsel %vm29, %v776, -inf
    %v779 = vsel %vm29, %v777, -inf
    %v780 = vmax.f32 %v778, %v779
    %v781 = vrot.slane %v780, 4
    %v782 = vmax.f32 %v780, %v781
    %v783 = vrot.slane %v782, 2
    %v784 = vmax.f32 %v782, %v783
    %v785 = vrot.slane %v784, 1
    %v786 = vmax.f32 %v784, %v785
    %787 = vset.pattern.permute.xlu0 1
    %788 = vperm.xlu0 %787, %v221
    %v789 = vpop.permute.xlu0 %788
    %791 = vset.pattern.permute.xlu0 1
    %792 = vperm.xlu0 %791, %v226
    %v793 = vpop.permute.xlu0 %792
    %v795 = vadd.f32 %v789, %v640
    %v796 = vadd.f32 %v793, %v640
    %vm797 = vcmp.gt.f32.partialorder %v795, 0.0
    %vm798 = vcmp.gt.f32.partialorder %v796, 0.0
    %v799 = vmul.f32 %v795, 0.2
    %v800 = vmul.f32 %v796, 0.2
    %v801 = vsel %vm797, %v795, %v799
    %v802 = vsel %vm798, %v796, %v800
    %805 = vrot.lane.b32.xlu0 %v801, 112
    %v806 = vpop.permute.xlu0 %805
    %807 = vrot.lane.b32.xlu0 %v802, 112
    %v808 = vpop.permute.xlu0 %807
    %v811 = vsel %vm484, %v806, -9e+15
    %v812 = vsel %vm485, %v808, -9e+15
    %v813 = vsel %vm332, %v811, -inf
    %814 = vmax.xlane.f32.xlu0 %v813
    %v815 = vpop.xlane.xlu0 %814
    %v816 = vsel %vm332, %v812, -inf
    %817 = vmax.xlane.f32.xlu0 %v816
    %v818 = vpop.xlane.xlu0 %817
    %v819 = vsub.f32 %v811, %v815
    %v820 = vsub.f32 %v812, %v818
    %v821 = vmul.f32 %v819, 1.442695
    %v822 = vpow.pop %v821
    %v823 = vmul.f32 %v820, 1.442695
    %v824 = vpow.pop %v823
    %v825 = vsel %vm332, %v822, 0.0
    %826 = vadd.xlane.f32.xlu0 %v825
    %v827 = vpop.xlane.xlu0 %826
    %v828 = vsel %vm332, %v824, 0.0
    %829 = vadd.xlane.f32.xlu0 %v828
    %v830 = vpop.xlane.xlu0 %829
    %v831 = vrcp.pop %v827
    %v832 = vrcp.pop %v830
    %v833 = vmul.f32 %v827, %v831
    %v834 = vmul.f32 %v830, %v832
    %v835 = vsub.f32 2.0, %v833
    %v836 = vsub.f32 2.0, %v834
    %v837 = vmul.f32 %v831, %v835
    %v838 = vmul.f32 %v832, %v836
    %v839 = vmul.f32 %v822, %v837
    %v840 = vmul.f32 %v824, %v838
    %841 = vrot.lane.b32.xlu0 %v119, 120
    %v842 = vpop.permute.xlu0 %841
    %843 = vrot.lane.b32.xlu0 %v124, 120
    %v844 = vpop.permute.xlu0 %843
    %v848 = vsel %vm332, %v839, 0
    %v851 = vsel %vm332, %v840, 0
    %853 = vmatprep.subr.mxu0 0.0
    %854 = vmatpush1.msra.mxu0 %v842
    %855 = vmatprep.subr.mxu0 0.0
    %856 = vmatpush1.msra.mxu0 %v844
    %857 = vmatprep.subr.mxu0 0.0
    %858 = vmatpush1.msra.mxu0 0.0
    %859 = vmatprep.subr.mxu0 0.0
    %860 = vmatpush1.msra.mxu0 0.0
    %861 = vmatprep.subr.mxu0 0.0
    %862 = vmatpush1.msra.mxu0 0.0
    %863 = vmatprep.subr.mxu0 0.0
    %864 = vmatpush1.msra.mxu0 0.0
    %865 = vmatprep.subr.mxu0 0.0
    %866 = vmatpush1.msra.mxu0 0.0
    %867 = vmatprep.subr.mxu0 0.0
    %868 = vmatpush1.msra.mxu0 0.0
    %869 = vmatprep.subr.mxu0 0.0
    %870 = vmatpush1.msra.mxu0 0.0
    %871 = vmatprep.subr.mxu0 0.0
    %872 = vmatpush1.msra.mxu0 0.0
    %873 = vmatprep.subr.mxu0 0.0
    %874 = vmatpush1.msra.mxu0 0.0
    %875 = vmatprep.subr.mxu0 0.0
    %876 = vmatpush1.msra.mxu0 0.0
    %877 = vmatprep.subr.mxu0 0.0
    %878 = vmatpush1.msra.mxu0 0.0
    %879 = vmatprep.subr.mxu0 0.0
    %880 = vmatpush1.msra.mxu0 0.0
    %881 = vmatprep.subr.mxu0 0.0
    %882 = vmatpush1.msra.mxu0 0.0
    %883 = vmatprep.subr.mxu0 0.0
    %884 = vmatpush1.msra.mxu0 0.0
    %885 = vmatprep.subr.mxu0 0.0
    %886 = vmatpush1.msra.mxu0 0.0
    %887 = vmatprep.subr.mxu0 0.0
    %888 = vmatpush1.msra.mxu0 0.0
    %889 = vmatprep.subr.mxu0 0.0
    %890 = vmatpush1.msra.mxu0 0.0
    %891 = vmatprep.subr.mxu0 0.0
    %892 = vmatpush1.msra.mxu0 0.0
    %893 = vmatprep.subr.mxu0 0.0
    %894 = vmatpush1.msra.mxu0 0.0
    %895 = vmatprep.subr.mxu0 0.0
    %896 = vmatpush1.msra.mxu0 0.0
    %897 = vmatprep.subr.mxu0 0.0
    %898 = vmatpush1.msra.mxu0 0.0
    %899 = vmatprep.subr.mxu0 0.0
    %900 = vmatpush1.msra.mxu0 0.0
    %901 = vmatprep.subr.mxu0 0.0
    %902 = vmatpush1.msra.mxu0 0.0
    %903 = vmatprep.subr.mxu0 0.0
    %904 = vmatpush1.msra.mxu0 0.0
    %905 = vmatprep.subr.mxu0 0.0
    %906 = vmatpush1.msra.mxu0 0.0
    %907 = vmatprep.subr.mxu0 0.0
    %908 = vmatpush1.msra.mxu0 0.0
    %909 = vmatprep.subr.mxu0 0.0
    %910 = vmatpush1.msra.mxu0 0.0
    %911 = vmatprep.subr.mxu0 0.0
    %912 = vmatpush1.msra.mxu0 0.0
    %913 = vmatprep.subr.mxu0 0.0
    %914 = vmatpush1.msra.mxu0 0.0
    %915 = vmatprep.subr.mxu0 0.0
    %916 = vmatpush1.msra.mxu0 0.0
    %917 = vmatprep.mubr.f32.mxu0 0.0
    %918 = vmatmul.mubr.f32.gmra.mrb[0].mxu0 %v848
    %v919 = vpop.f32.mrb[0].mxu0
    %v920 = vadd.f32 0.0, %v919
    %v921 = vpop.f32.mrb[0].mxu0
    %922 = vmatprep.mubr.f32.mxu0 0.0
    %923 = vmatmul.mubr.f32.gmra.mrb[0].mxu0 %v851
    %v924 = vpop.f32.mrb[0].mxu0
    %v925 = vadd.f32 0.0, %v924
    %v926 = vpop.f32.mrb[0].mxu0
    %927 = vdwg.mxu0
    %vm928 = vcmp.gt.f32.partialorder %v920, 0.0
    %vm929 = vcmp.gt.f32.partialorder %v925, 0.0
    %v930 = vmin.f32 %v920, 0.0
    %v931 = vmin.f32 %v925, 0.0
    %v932 = vmul.f32 %v930, 1.442695
    %v933 = vpow.pop %v932
    %v934 = vmul.f32 %v931, 1.442695
    %v935 = vpow.pop %v934
    %v936 = vsub.f32 %v933, 1.0
    %v937 = vsub.f32 %v935, 1.0
    %v938 = vsel %vm928, %v920, %v936
    %v939 = vsel %vm929, %v925, %v937
    %v940 = vsel %vm29, %v938, -inf
    %v941 = vsel %vm29, %v939, -inf
    %v942 = vmax.f32 %v940, %v941
    %v943 = vrot.slane %v942, 4
    %v944 = vmax.f32 %v942, %v943
    %v945 = vrot.slane %v944, 2
    %v946 = vmax.f32 %v944, %v945
    %v947 = vrot.slane %v946, 1
    %v948 = vmax.f32 %v946, %v947
    %v949 = vsel %vm626, %v786, %v948
    %v951 = vsel %vm29, %v949, 0
    %953 = vmatprep.subr.mxu0 0.0
    %954 = vmatpush1.msra.mxu0 %v628
    %955 = vmatprep.subr.mxu0 0.0
    %956 = vmatpush1.msra.mxu0 0.0
    %957 = vmatprep.subr.mxu0 0.0
    %958 = vmatpush1.msra.mxu0 0.0
    %959 = vmatprep.subr.mxu0 0.0
    %960 = vmatpush1.msra.mxu0 0.0
    %961 = vmatprep.subr.mxu0 0.0
    %962 = vmatpush1.msra.mxu0 0.0
    %963 = vmatprep.subr.mxu0 0.0
    %964 = vmatpush1.msra.mxu0 0.0
    %965 = vmatprep.subr.mxu0 0.0
    %966 = vmatpush1.msra.mxu0 0.0
    %967 = vmatprep.subr.mxu0 0.0
    %968 = vmatpush1.msra.mxu0 0.0
    %969 = vmatprep.subr.mxu0 0.0
    %970 = vmatpush1.msra.mxu0 0.0
    %971 = vmatprep.subr.mxu0 0.0
    %972 = vmatpush1.msra.mxu0 0.0
    %973 = vmatprep.subr.mxu0 0.0
    %974 = vmatpush1.msra.mxu0 0.0
    %975 = vmatprep.subr.mxu0 0.0
    %976 = vmatpush1.msra.mxu0 0.0
    %977 = vmatprep.subr.mxu0 0.0
    %978 = vmatpush1.msra.mxu0 0.0
    %979 = vmatprep.subr.mxu0 0.0
    %980 = vmatpush1.msra.mxu0 0.0
    %981 = vmatprep.subr.mxu0 0.0
    %982 = vmatpush1.msra.mxu0 0.0
    %983 = vmatprep.subr.mxu0 0.0
    %984 = vmatpush1.msra.mxu0 0.0
    %985 = vmatprep.subr.mxu0 0.0
    %986 = vmatpush1.msra.mxu0 0.0
    %987 = vmatprep.subr.mxu0 0.0
    %988 = vmatpush1.msra.mxu0 0.0
    %989 = vmatprep.subr.mxu0 0.0
    %990 = vmatpush1.msra.mxu0 0.0
    %991 = vmatprep.subr.mxu0 0.0
    %992 = vmatpush1.msra.mxu0 0.0
    %993 = vmatprep.subr.mxu0 0.0
    %994 = vmatpush1.msra.mxu0 0.0
    %995 = vmatprep.subr.mxu0 0.0
    %996 = vmatpush1.msra.mxu0 0.0
    %997 = vmatprep.subr.mxu0 0.0
    %998 = vmatpush1.msra.mxu0 0.0
    %999 = vmatprep.subr.mxu0 0.0
    %1000 = vmatpush1.msra.mxu0 0.0
    %1001 = vmatprep.subr.mxu0 0.0
    %1002 = vmatpush1.msra.mxu0 0.0
    %1003 = vmatprep.subr.mxu0 0.0
    %1004 = vmatpush1.msra.mxu0 0.0
    %1005 = vmatprep.subr.mxu0 0.0
    %1006 = vmatpush1.msra.mxu0 0.0
    %1007 = vmatprep.subr.mxu0 0.0
    %1008 = vmatpush1.msra.mxu0 0.0
    %1009 = vmatprep.subr.mxu0 0.0
    %1010 = vmatpush1.msra.mxu0 0.0
    %1011 = vmatprep.subr.mxu0 0.0
    %1012 = vmatpush1.msra.mxu0 0.0
    %1013 = vmatprep.subr.mxu0 0.0
    %1014 = vmatpush1.msra.mxu0 0.0
    %1015 = vmatprep.subr.mxu0 0.0
    %1016 = vmatpush1.msra.mxu0 0.0
    %1017 = vmatprep.mubr.f32.mxu0 0.0
    %1018 = vmatmul.mubr.f32.gmra.mrb[0].mxu0 %v951
    %v1019 = vpop.f32.mrb[0].mxu0
    %v1020 = vadd.f32 0.0, %v1019
    %v1021 = vpop.f32.mrb[0].mxu0
    %1022 = vdwg.mxu0
    %v1024 = vsel %vm29, %v627, 0
    %1026 = vmatprep.subr.mxu0 0.0
    %1027 = vmatpush1.msra.mxu0 %v303
    %1028 = vmatprep.subr.mxu0 0.0
    %1029 = vmatpush1.msra.mxu0 0.0
    %1030 = vmatprep.subr.mxu0 0.0
    %1031 = vmatpush1.msra.mxu0 0.0
    %1032 = vmatprep.subr.mxu0 0.0
    %1033 = vmatpush1.msra.mxu0 0.0
    %1034 = vmatprep.subr.mxu0 0.0
    %1035 = vmatpush1.msra.mxu0 0.0
    %1036 = vmatprep.subr.mxu0 0.0
    %1037 = vmatpush1.msra.mxu0 0.0
    %1038 = vmatprep.subr.mxu0 0.0
    %1039 = vmatpush1.msra.mxu0 0.0
    %1040 = vmatprep.subr.mxu0 0.0
    %1041 = vmatpush1.msra.mxu0 0.0
    %1042 = vmatprep.subr.mxu0 0.0
    %1043 = vmatpush1.msra.mxu0 0.0
    %1044 = vmatprep.subr.mxu0 0.0
    %1045 = vmatpush1.msra.mxu0 0.0
    %1046 = vmatprep.subr.mxu0 0.0
    %1047 = vmatpush1.msra.mxu0 0.0
    %1048 = vmatprep.subr.mxu0 0.0
    %1049 = vmatpush1.msra.mxu0 0.0
    %1050 = vmatprep.subr.mxu0 0.0
    %1051 = vmatpush1.msra.mxu0 0.0
    %1052 = vmatprep.subr.mxu0 0.0
    %1053 = vmatpush1.msra.mxu0 0.0
    %1054 = vmatprep.subr.mxu0 0.0
    %1055 = vmatpush1.msra.mxu0 0.0
    %1056 = vmatprep.subr.mxu0 0.0
    %1057 = vmatpush1.msra.mxu0 0.0
    %1058 = vmatprep.subr.mxu0 0.0
    %1059 = vmatpush1.msra.mxu0 0.0
    %1060 = vmatprep.subr.mxu0 0.0
    %1061 = vmatpush1.msra.mxu0 0.0
    %1062 = vmatprep.subr.mxu0 0.0
    %1063 = vmatpush1.msra.mxu0 0.0
    %1064 = vmatprep.subr.mxu0 0.0
    %1065 = vmatpush1.msra.mxu0 0.0
    %1066 = vmatprep.subr.mxu0 0.0
    %1067 = vmatpush1.msra.mxu0 0.0
    %1068 = vmatprep.subr.mxu0 0.0
    %1069 = vmatpush1.msra.mxu0 0.0
    %1070 = vmatprep.subr.mxu0 0.0
    %1071 = vmatpush1.msra.mxu0 0.0
    %1072 = vmatprep.subr.mxu0 0.0
    %1073 = vmatpush1.msra.mxu0 0.0
    %1074 = vmatprep.subr.mxu0 0.0
    %1075 = vmatpush1.msra.mxu0 0.0
    %1076 = vmatprep.subr.mxu0 0.0
    %1077 = vmatpush1.msra.mxu0 0.0
    %1078 = vmatprep.subr.mxu0 0.0
    %1079 = vmatpush1.msra.mxu0 0.0
    %1080 = vmatprep.subr.mxu0 0.0
    %1081 = vmatpush1.msra.mxu0 0.0
    %1082 = vmatprep.subr.mxu0 0.0
    %1083 = vmatpush1.msra.mxu0 0.0
    %1084 = vmatprep.subr.mxu0 0.0
    %1085 = vmatpush1.msra.mxu0 0.0
    %1086 = vmatprep.subr.mxu0 0.0
    %1087 = vmatpush1.msra.mxu0 0.0
    %1088 = vmatprep.subr.mxu0 0.0
    %1089 = vmatpush1.msra.mxu0 0.0
    %1090 = vmatprep.mubr.f32.mxu0 0.0
    %1091 = vmatmul.mubr.f32.gmra.mrb[0].mxu0 %v1024
    %v1092 = vpop.f32.mrb[0].mxu0
    %v1093 = vadd.f32 %v1020, %v1092
    %v1094 = vpop.f32.mrb[0].mxu0
    %1095 = vdwg.mxu0
    %v1096 = vld [vmem:[%s5 + $0x10] sm:$0xff]
    %1097 = vset.pattern.permute.xlu0 2
    %1098 = vperm.xlu0 %1097, %v211
    %v1099 = vpop.permute.xlu0 %1098
    %1101 = vset.pattern.permute.xlu0 2
    %1102 = vperm.xlu0 %1101, %v216
    %v1103 = vpop.permute.xlu0 %1102
    %v1105 = vlaneseq
    %v1106 = vshrl.u32 %v1105, 7
    %v1107 = vsub.s32 2, %v1106
    %v1108 = vrot.slane %v300, %v1107
    %v1109 = vadd.f32 %v1099, %v1108
    %v1110 = vadd.f32 %v1103, %v1108
    %vm1111 = vcmp.gt.f32.partialorder %v1109, 0.0
    %vm1112 = vcmp.gt.f32.partialorder %v1110, 0.0
    %v1113 = vmul.f32 %v1109, 0.2
    %v1114 = vmul.f32 %v1110, 0.2
    %v1115 = vsel %vm1111, %v1109, %v1113
    %v1116 = vsel %vm1112, %v1110, %v1114
    %v1117 = vsel %vm328, %v1115, -9e+15
    %v1118 = vsel %vm329, %v1116, -9e+15
    %v1119 = vsel %vm332, %v1117, -inf
    %1120 = vmax.xlane.f32.xlu0 %v1119
    %v1121 = vpop.xlane.xlu0 %1120
    %v1122 = vsel %vm332, %v1118, -inf
    %1123 = vmax.xlane.f32.xlu0 %v1122
    %v1124 = vpop.xlane.xlu0 %1123
    %v1125 = vsub.f32 %v1117, %v1121
    %v1126 = vsub.f32 %v1118, %v1124
    %v1127 = vmul.f32 %v1125, 1.442695
    %v1128 = vpow.pop %v1127
    %v1129 = vmul.f32 %v1126, 1.442695
    %v1130 = vpow.pop %v1129
    %v1131 = vsel %vm332, %v1128, 0.0
    %1132 = vadd.xlane.f32.xlu0 %v1131
    %v1133 = vpop.xlane.xlu0 %1132
    %v1134 = vsel %vm332, %v1130, 0.0
    %1135 = vadd.xlane.f32.xlu0 %v1134
    %v1136 = vpop.xlane.xlu0 %1135
    %v1137 = vrcp.pop %v1133
    %v1138 = vrcp.pop %v1136
    %v1139 = vmul.f32 %v1133, %v1137
    %v1140 = vmul.f32 %v1136, %v1138
    %v1141 = vsub.f32 2.0, %v1139
    %v1142 = vsub.f32 2.0, %v1140
    %v1143 = vmul.f32 %v1137, %v1141
    %v1144 = vmul.f32 %v1138, %v1142
    %v1145 = vmul.f32 %v1128, %v1143
    %v1146 = vmul.f32 %v1130, %v1144
    %1147 = vrot.lane.b32.xlu0 %v109, 112
    %v1148 = vpop.permute.xlu0 %1147
    %1149 = vrot.lane.b32.xlu0 %v114, 112
    %v1150 = vpop.permute.xlu0 %1149
    %v1154 = vsel %vm332, %v1145, 0
    %v1157 = vsel %vm332, %v1146, 0
    %1159 = vmatprep.subr.mxu0 0.0
    %1160 = vmatpush1.msra.mxu0 %v1148
    %1161 = vmatprep.subr.mxu0 0.0
    %1162 = vmatpush1.msra.mxu0 %v1150
    %1163 = vmatprep.subr.mxu0 0.0
    %1164 = vmatpush1.msra.mxu0 0.0
    %1165 = vmatprep.subr.mxu0 0.0
    %1166 = vmatpush1.msra.mxu0 0.0
    %1167 = vmatprep.subr.mxu0 0.0
    %1168 = vmatpush1.msra.mxu0 0.0
    %1169 = vmatprep.subr.mxu0 0.0
    %1170 = vmatpush1.msra.mxu0 0.0
    %1171 = vmatprep.subr.mxu0 0.0
    %1172 = vmatpush1.msra.mxu0 0.0
    %1173 = vmatprep.subr.mxu0 0.0
    %1174 = vmatpush1.msra.mxu0 0.0
    %1175 = vmatprep.subr.mxu0 0.0
    %1176 = vmatpush1.msra.mxu0 0.0
    %1177 = vmatprep.subr.mxu0 0.0
    %1178 = vmatpush1.msra.mxu0 0.0
    %1179 = vmatprep.subr.mxu0 0.0
    %1180 = vmatpush1.msra.mxu0 0.0
    %1181 = vmatprep.subr.mxu0 0.0
    %1182 = vmatpush1.msra.mxu0 0.0
    %1183 = vmatprep.subr.mxu0 0.0
    %1184 = vmatpush1.msra.mxu0 0.0
    %1185 = vmatprep.subr.mxu0 0.0
    %1186 = vmatpush1.msra.mxu0 0.0
    %1187 = vmatprep.subr.mxu0 0.0
    %1188 = vmatpush1.msra.mxu0 0.0
    %1189 = vmatprep.subr.mxu0 0.0
    %1190 = vmatpush1.msra.mxu0 0.0
    %1191 = vmatprep.subr.mxu0 0.0
    %1192 = vmatpush1.msra.mxu0 0.0
    %1193 = vmatprep.subr.mxu0 0.0
    %1194 = vmatpush1.msra.mxu0 0.0
    %1195 = vmatprep.subr.mxu0 0.0
    %1196 = vmatpush1.msra.mxu0 0.0
    %1197 = vmatprep.subr.mxu0 0.0
    %1198 = vmatpush1.msra.mxu0 0.0
    %1199 = vmatprep.subr.mxu0 0.0
    %1200 = vmatpush1.msra.mxu0 0.0
    %1201 = vmatprep.subr.mxu0 0.0
    %1202 = vmatpush1.msra.mxu0 0.0
    %1203 = vmatprep.subr.mxu0 0.0
    %1204 = vmatpush1.msra.mxu0 0.0
    %1205 = vmatprep.subr.mxu0 0.0
    %1206 = vmatpush1.msra.mxu0 0.0
    %1207 = vmatprep.subr.mxu0 0.0
    %1208 = vmatpush1.msra.mxu0 0.0
    %1209 = vmatprep.subr.mxu0 0.0
    %1210 = vmatpush1.msra.mxu0 0.0
    %1211 = vmatprep.subr.mxu0 0.0
    %1212 = vmatpush1.msra.mxu0 0.0
    %1213 = vmatprep.subr.mxu0 0.0
    %1214 = vmatpush1.msra.mxu0 0.0
    %1215 = vmatprep.subr.mxu0 0.0
    %1216 = vmatpush1.msra.mxu0 0.0
    %1217 = vmatprep.subr.mxu0 0.0
    %1218 = vmatpush1.msra.mxu0 0.0
    %1219 = vmatprep.subr.mxu0 0.0
    %1220 = vmatpush1.msra.mxu0 0.0
    %1221 = vmatprep.subr.mxu0 0.0
    %1222 = vmatpush1.msra.mxu0 0.0
    %1223 = vmatprep.mubr.f32.mxu0 0.0
    %1224 = vmatmul.mubr.f32.gmra.mrb[0].mxu0 %v1154
    %v1225 = vpop.f32.mrb[0].mxu0
    %v1226 = vadd.f32 0.0, %v1225
    %v1227 = vpop.f32.mrb[0].mxu0
    %1228 = vmatprep.mubr.f32.mxu0 0.0
    %1229 = vmatmul.mubr.f32.gmra.mrb[0].mxu0 %v1157
    %v1230 = vpop.f32.mrb[0].mxu0
    %v1231 = vadd.f32 0.0, %v1230
    %v1232 = vpop.f32.mrb[0].mxu0
    %1233 = vdwg.mxu0
    %vm1234 = vcmp.gt.f32.partialorder %v1226, 0.0
    %vm1235 = vcmp.gt.f32.partialorder %v1231, 0.0
    %v1236 = vmin.f32 %v1226, 0.0
    %v1237 = vmin.f32 %v1231, 0.0
    %v1238 = vmul.f32 %v1236, 1.442695
    %v1239 = vpow.pop %v1238
    %v1240 = vmul.f32 %v1237, 1.442695
    %v1241 = vpow.pop %v1240
    %v1242 = vsub.f32 %v1239, 1.0
    %v1243 = vsub.f32 %v1241, 1.0
    %v1244 = vsel %vm1234, %v1226, %v1242
    %v1245 = vsel %vm1235, %v1231, %v1243
    %v1246 = vsel %vm29, %v1244, -inf
    %v1247 = vsel %vm29, %v1245, -inf
    %v1248 = vmax.f32 %v1246, %v1247
    %v1249 = vrot.slane %v1248, 4
    %v1250 = vmax.f32 %v1248, %v1249
    %v1251 = vrot.slane %v1250, 2
    %v1252 = vmax.f32 %v1250, %v1251
    %v1253 = vrot.slane %v1252, 1
    %v1254 = vmax.f32 %v1252, %v1253
    %1255 = vset.pattern.permute.xlu0 2
    %1256 = vperm.xlu0 %1255, %v221
    %v1257 = vpop.permute.xlu0 %1256
    %1259 = vset.pattern.permute.xlu0 2
    %1260 = vperm.xlu0 %1259, %v226
    %v1261 = vpop.permute.xlu0 %1260
    %v1263 = vadd.f32 %v1257, %v1108
    %v1264 = vadd.f32 %v1261, %v1108
    %vm1265 = vcmp.gt.f32.partialorder %v1263, 0.0
    %vm1266 = vcmp.gt.f32.partialorder %v1264, 0.0
    %v1267 = vmul.f32 %v1263, 0.2
    %v1268 = vmul.f32 %v1264, 0.2
    %v1269 = vsel %vm1265, %v1263, %v1267
    %v1270 = vsel %vm1266, %v1264, %v1268
    %1273 = vrot.lane.b32.xlu0 %v1269, 112
    %v1274 = vpop.permute.xlu0 %1273
    %1275 = vrot.lane.b32.xlu0 %v1270, 112
    %v1276 = vpop.permute.xlu0 %1275
    %v1279 = vsel %vm484, %v1274, -9e+15
    %v1280 = vsel %vm485, %v1276, -9e+15
    %v1281 = vsel %vm332, %v1279, -inf
    %1282 = vmax.xlane.f32.xlu0 %v1281
    %v1283 = vpop.xlane.xlu0 %1282
    %v1284 = vsel %vm332, %v1280, -inf
    %1285 = vmax.xlane.f32.xlu0 %v1284
    %v1286 = vpop.xlane.xlu0 %1285
    %v1287 = vsub.f32 %v1279, %v1283
    %v1288 = vsub.f32 %v1280, %v1286
    %v1289 = vmul.f32 %v1287, 1.442695
    %v1290 = vpow.pop %v1289
    %v1291 = vmul.f32 %v1288, 1.442695
    %v1292 = vpow.pop %v1291
    %v1293 = vsel %vm332, %v1290, 0.0
    %1294 = vadd.xlane.f32.xlu0 %v1293
    %v1295 = vpop.xlane.xlu0 %1294
    %v1296 = vsel %vm332, %v1292, 0.0
    %1297 = vadd.xlane.f32.xlu0 %v1296
    %v1298 = vpop.xlane.xlu0 %1297
    %v1299 = vrcp.pop %v1295
    %v1300 = vrcp.pop %v1298
    %v1301 = vmul.f32 %v1295, %v1299
    %v1302 = vmul.f32 %v1298, %v1300
    %v1303 = vsub.f32 2.0, %v1301
    %v1304 = vsub.f32 2.0, %v1302
    %v1305 = vmul.f32 %v1299, %v1303
    %v1306 = vmul.f32 %v1300, %v1304
    %v1307 = vmul.f32 %v1290, %v1305
    %v1308 = vmul.f32 %v1292, %v1306
    %1309 = vrot.lane.b32.xlu0 %v119, 112
    %v1310 = vpop.permute.xlu0 %1309
    %1311 = vrot.lane.b32.xlu0 %v124, 112
    %v1312 = vpop.permute.xlu0 %1311
    %v1316 = vsel %vm332, %v1307, 0
    %v1319 = vsel %vm332, %v1308, 0
    %1321 = vmatprep.subr.mxu0 0.0
    %1322 = vmatpush1.msra.mxu0 %v1310
    %1323 = vmatprep.subr.mxu0 0.0
    %1324 = vmatpush1.msra.mxu0 %v1312
    %1325 = vmatprep.subr.mxu0 0.0
    %1326 = vmatpush1.msra.mxu0 0.0
    %1327 = vmatprep.subr.mxu0 0.0
    %1328 = vmatpush1.msra.mxu0 0.0
    %1329 = vmatprep.subr.mxu0 0.0
    %1330 = vmatpush1.msra.mxu0 0.0
    %1331 = vmatprep.subr.mxu0 0.0
    %1332 = vmatpush1.msra.mxu0 0.0
    %1333 = vmatprep.subr.mxu0 0.0
    %1334 = vmatpush1.msra.mxu0 0.0
    %1335 = vmatprep.subr.mxu0 0.0
    %1336 = vmatpush1.msra.mxu0 0.0
    %1337 = vmatprep.subr.mxu0 0.0
    %1338 = vmatpush1.msra.mxu0 0.0
    %1339 = vmatprep.subr.mxu0 0.0
    %1340 = vmatpush1.msra.mxu0 0.0
    %1341 = vmatprep.subr.mxu0 0.0
    %1342 = vmatpush1.msra.mxu0 0.0
    %1343 = vmatprep.subr.mxu0 0.0
    %1344 = vmatpush1.msra.mxu0 0.0
    %1345 = vmatprep.subr.mxu0 0.0
    %1346 = vmatpush1.msra.mxu0 0.0
    %1347 = vmatprep.subr.mxu0 0.0
    %1348 = vmatpush1.msra.mxu0 0.0
    %1349 = vmatprep.subr.mxu0 0.0
    %1350 = vmatpush1.msra.mxu0 0.0
    %1351 = vmatprep.subr.mxu0 0.0
    %1352 = vmatpush1.msra.mxu0 0.0
    %1353 = vmatprep.subr.mxu0 0.0
    %1354 = vmatpush1.msra.mxu0 0.0
    %1355 = vmatprep.subr.mxu0 0.0
    %1356 = vmatpush1.msra.mxu0 0.0
    %1357 = vmatprep.subr.mxu0 0.0
    %1358 = vmatpush1.msra.mxu0 0.0
    %1359 = vmatprep.subr.mxu0 0.0
    %1360 = vmatpush1.msra.mxu0 0.0
    %1361 = vmatprep.subr.mxu0 0.0
    %1362 = vmatpush1.msra.mxu0 0.0
    %1363 = vmatprep.subr.mxu0 0.0
    %1364 = vmatpush1.msra.mxu0 0.0
    %1365 = vmatprep.subr.mxu0 0.0
    %1366 = vmatpush1.msra.mxu0 0.0
    %1367 = vmatprep.subr.mxu0 0.0
    %1368 = vmatpush1.msra.mxu0 0.0
    %1369 = vmatprep.subr.mxu0 0.0
    %1370 = vmatpush1.msra.mxu0 0.0
    %1371 = vmatprep.subr.mxu0 0.0
    %1372 = vmatpush1.msra.mxu0 0.0
    %1373 = vmatprep.subr.mxu0 0.0
    %1374 = vmatpush1.msra.mxu0 0.0
    %1375 = vmatprep.subr.mxu0 0.0
    %1376 = vmatpush1.msra.mxu0 0.0
    %1377 = vmatprep.subr.mxu0 0.0
    %1378 = vmatpush1.msra.mxu0 0.0
    %1379 = vmatprep.subr.mxu0 0.0
    %1380 = vmatpush1.msra.mxu0 0.0
    %1381 = vmatprep.subr.mxu0 0.0
    %1382 = vmatpush1.msra.mxu0 0.0
    %1383 = vmatprep.subr.mxu0 0.0
    %1384 = vmatpush1.msra.mxu0 0.0
    %1385 = vmatprep.mubr.f32.mxu0 0.0
    %1386 = vmatmul.mubr.f32.gmra.mrb[0].mxu0 %v1316
    %v1387 = vpop.f32.mrb[0].mxu0
    %v1388 = vadd.f32 0.0, %v1387
    %v1389 = vpop.f32.mrb[0].mxu0
    %1390 = vmatprep.mubr.f32.mxu0 0.0
    %1391 = vmatmul.mubr.f32.gmra.mrb[0].mxu0 %v1319
    %v1392 = vpop.f32.mrb[0].mxu0
    %v1393 = vadd.f32 0.0, %v1392
    %v1394 = vpop.f32.mrb[0].mxu0
    %1395 = vdwg.mxu0
    %vm1396 = vcmp.gt.f32.partialorder %v1388, 0.0
    %vm1397 = vcmp.gt.f32.partialorder %v1393, 0.0
    %v1398 = vmin.f32 %v1388, 0.0
    %v1399 = vmin.f32 %v1393, 0.0
    %v1400 = vmul.f32 %v1398, 1.442695
    %v1401 = vpow.pop %v1400
    %v1402 = vmul.f32 %v1399, 1.442695
    %v1403 = vpow.pop %v1402
    %v1404 = vsub.f32 %v1401, 1.0
    %v1405 = vsub.f32 %v1403, 1.0
    %v1406 = vsel %vm1396, %v1388, %v1404
    %v1407 = vsel %vm1397, %v1393, %v1405
    %v1408 = vsel %vm29, %v1406, -inf
    %v1409 = vsel %vm29, %v1407, -inf
    %v1410 = vmax.f32 %v1408, %v1409
    %v1411 = vrot.slane %v1410, 4
    %v1412 = vmax.f32 %v1410, %v1411
    %v1413 = vrot.slane %v1412, 2
    %v1414 = vmax.f32 %v1412, %v1413
    %v1415 = vrot.slane %v1414, 1
    %v1416 = vmax.f32 %v1414, %v1415
    %v1417 = vsel %vm626, %v1254, %v1416
    %v1419 = vsel %vm29, %v1417, 0
    %1421 = vmatprep.subr.mxu0 0.0
    %1422 = vmatpush1.msra.mxu0 %v1096
    %1423 = vmatprep.subr.mxu0 0.0
    %1424 = vmatpush1.msra.mxu0 0.0
    %1425 = vmatprep.subr.mxu0 0.0
    %1426 = vmatpush1.msra.mxu0 0.0
    %1427 = vmatprep.subr.mxu0 0.0
    %1428 = vmatpush1.msra.mxu0 0.0
    %1429 = vmatprep.subr.mxu0 0.0
    %1430 = vmatpush1.msra.mxu0 0.0
    %1431 = vmatprep.subr.mxu0 0.0
    %1432 = vmatpush1.msra.mxu0 0.0
    %1433 = vmatprep.subr.mxu0 0.0
    %1434 = vmatpush1.msra.mxu0 0.0
    %1435 = vmatprep.subr.mxu0 0.0
    %1436 = vmatpush1.msra.mxu0 0.0
    %1437 = vmatprep.subr.mxu0 0.0
    %1438 = vmatpush1.msra.mxu0 0.0
    %1439 = vmatprep.subr.mxu0 0.0
    %1440 = vmatpush1.msra.mxu0 0.0
    %1441 = vmatprep.subr.mxu0 0.0
    %1442 = vmatpush1.msra.mxu0 0.0
    %1443 = vmatprep.subr.mxu0 0.0
    %1444 = vmatpush1.msra.mxu0 0.0
    %1445 = vmatprep.subr.mxu0 0.0
    %1446 = vmatpush1.msra.mxu0 0.0
    %1447 = vmatprep.subr.mxu0 0.0
    %1448 = vmatpush1.msra.mxu0 0.0
    %1449 = vmatprep.subr.mxu0 0.0
    %1450 = vmatpush1.msra.mxu0 0.0
    %1451 = vmatprep.subr.mxu0 0.0
    %1452 = vmatpush1.msra.mxu0 0.0
    %1453 = vmatprep.subr.mxu0 0.0
    %1454 = vmatpush1.msra.mxu0 0.0
    %1455 = vmatprep.subr.mxu0 0.0
    %1456 = vmatpush1.msra.mxu0 0.0
    %1457 = vmatprep.subr.mxu0 0.0
    %1458 = vmatpush1.msra.mxu0 0.0
    %1459 = vmatprep.subr.mxu0 0.0
    %1460 = vmatpush1.msra.mxu0 0.0
    %1461 = vmatprep.subr.mxu0 0.0
    %1462 = vmatpush1.msra.mxu0 0.0
    %1463 = vmatprep.subr.mxu0 0.0
    %1464 = vmatpush1.msra.mxu0 0.0
    %1465 = vmatprep.subr.mxu0 0.0
    %1466 = vmatpush1.msra.mxu0 0.0
    %1467 = vmatprep.subr.mxu0 0.0
    %1468 = vmatpush1.msra.mxu0 0.0
    %1469 = vmatprep.subr.mxu0 0.0
    %1470 = vmatpush1.msra.mxu0 0.0
    %1471 = vmatprep.subr.mxu0 0.0
    %1472 = vmatpush1.msra.mxu0 0.0
    %1473 = vmatprep.subr.mxu0 0.0
    %1474 = vmatpush1.msra.mxu0 0.0
    %1475 = vmatprep.subr.mxu0 0.0
    %1476 = vmatpush1.msra.mxu0 0.0
    %1477 = vmatprep.subr.mxu0 0.0
    %1478 = vmatpush1.msra.mxu0 0.0
    %1479 = vmatprep.subr.mxu0 0.0
    %1480 = vmatpush1.msra.mxu0 0.0
    %1481 = vmatprep.subr.mxu0 0.0
    %1482 = vmatpush1.msra.mxu0 0.0
    %1483 = vmatprep.subr.mxu0 0.0
    %1484 = vmatpush1.msra.mxu0 0.0
    %1485 = vmatprep.mubr.f32.mxu0 0.0
    %1486 = vmatmul.mubr.f32.gmra.mrb[0].mxu0 %v1419
    %v1487 = vpop.f32.mrb[0].mxu0
    %v1488 = vadd.f32 0.0, %v1487
    %v1489 = vpop.f32.mrb[0].mxu0
    %1490 = vdwg.mxu0
    %v1491 = vadd.f32 %v1093, %v1488
    %v1492 = vld [vmem:[%s5 + $0x18] sm:$0xff]
    %1493 = vset.pattern.permute.xlu0 3
    %1494 = vperm.xlu0 %1493, %v211
    %v1495 = vpop.permute.xlu0 %1494
    %1497 = vset.pattern.permute.xlu0 3
    %1498 = vperm.xlu0 %1497, %v216
    %v1499 = vpop.permute.xlu0 %1498
    %v1501 = vlaneseq
    %v1502 = vshrl.u32 %v1501, 7
    %v1503 = vsub.s32 3, %v1502
    %v1504 = vrot.slane %v300, %v1503
    %v1505 = vadd.f32 %v1495, %v1504
    %v1506 = vadd.f32 %v1499, %v1504
    %vm1507 = vcmp.gt.f32.partialorder %v1505, 0.0
    %vm1508 = vcmp.gt.f32.partialorder %v1506, 0.0
    %v1509 = vmul.f32 %v1505, 0.2
    %v1510 = vmul.f32 %v1506, 0.2
    %v1511 = vsel %vm1507, %v1505, %v1509
    %v1512 = vsel %vm1508, %v1506, %v1510
    %v1513 = vsel %vm328, %v1511, -9e+15
    %v1514 = vsel %vm329, %v1512, -9e+15
    %v1515 = vsel %vm332, %v1513, -inf
    %1516 = vmax.xlane.f32.xlu0 %v1515
    %v1517 = vpop.xlane.xlu0 %1516
    %v1518 = vsel %vm332, %v1514, -inf
    %1519 = vmax.xlane.f32.xlu0 %v1518
    %v1520 = vpop.xlane.xlu0 %1519
    %v1521 = vsub.f32 %v1513, %v1517
    %v1522 = vsub.f32 %v1514, %v1520
    %v1523 = vmul.f32 %v1521, 1.442695
    %v1524 = vpow.pop %v1523
    %v1525 = vmul.f32 %v1522, 1.442695
    %v1526 = vpow.pop %v1525
    %v1527 = vsel %vm332, %v1524, 0.0
    %1528 = vadd.xlane.f32.xlu0 %v1527
    %v1529 = vpop.xlane.xlu0 %1528
    %v1530 = vsel %vm332, %v1526, 0.0
    %1531 = vadd.xlane.f32.xlu0 %v1530
    %v1532 = vpop.xlane.xlu0 %1531
    %v1533 = vrcp.pop %v1529
    %v1534 = vrcp.pop %v1532
    %v1535 = vmul.f32 %v1529, %v1533
    %v1536 = vmul.f32 %v1532, %v1534
    %v1537 = vsub.f32 2.0, %v1535
    %v1538 = vsub.f32 2.0, %v1536
    %v1539 = vmul.f32 %v1533, %v1537
    %v1540 = vmul.f32 %v1534, %v1538
    %v1541 = vmul.f32 %v1524, %v1539
    %v1542 = vmul.f32 %v1526, %v1540
    %1543 = vrot.lane.b32.xlu0 %v109, 104
    %v1544 = vpop.permute.xlu0 %1543
    %1545 = vrot.lane.b32.xlu0 %v114, 104
    %v1546 = vpop.permute.xlu0 %1545
    %v1550 = vsel %vm332, %v1541, 0
    %v1553 = vsel %vm332, %v1542, 0
    %1555 = vmatprep.subr.mxu0 0.0
    %1556 = vmatpush1.msra.mxu0 %v1544
    %1557 = vmatprep.subr.mxu0 0.0
    %1558 = vmatpush1.msra.mxu0 %v1546
    %1559 = vmatprep.subr.mxu0 0.0
    %1560 = vmatpush1.msra.mxu0 0.0
    %1561 = vmatprep.subr.mxu0 0.0
    %1562 = vmatpush1.msra.mxu0 0.0
    %1563 = vmatprep.subr.mxu0 0.0
    %1564 = vmatpush1.msra.mxu0 0.0
    %1565 = vmatprep.subr.mxu0 0.0
    %1566 = vmatpush1.msra.mxu0 0.0
    %1567 = vmatprep.subr.mxu0 0.0
    %1568 = vmatpush1.msra.mxu0 0.0
    %1569 = vmatprep.subr.mxu0 0.0
    %1570 = vmatpush1.msra.mxu0 0.0
    %1571 = vmatprep.subr.mxu0 0.0
    %1572 = vmatpush1.msra.mxu0 0.0
    %1573 = vmatprep.subr.mxu0 0.0
    %1574 = vmatpush1.msra.mxu0 0.0
    %1575 = vmatprep.subr.mxu0 0.0
    %1576 = vmatpush1.msra.mxu0 0.0
    %1577 = vmatprep.subr.mxu0 0.0
    %1578 = vmatpush1.msra.mxu0 0.0
    %1579 = vmatprep.subr.mxu0 0.0
    %1580 = vmatpush1.msra.mxu0 0.0
    %1581 = vmatprep.subr.mxu0 0.0
    %1582 = vmatpush1.msra.mxu0 0.0
    %1583 = vmatprep.subr.mxu0 0.0
    %1584 = vmatpush1.msra.mxu0 0.0
    %1585 = vmatprep.subr.mxu0 0.0
    %1586 = vmatpush1.msra.mxu0 0.0
    %1587 = vmatprep.subr.mxu0 0.0
    %1588 = vmatpush1.msra.mxu0 0.0
    %1589 = vmatprep.subr.mxu0 0.0
    %1590 = vmatpush1.msra.mxu0 0.0
    %1591 = vmatprep.subr.mxu0 0.0
    %1592 = vmatpush1.msra.mxu0 0.0
    %1593 = vmatprep.subr.mxu0 0.0
    %1594 = vmatpush1.msra.mxu0 0.0
    %1595 = vmatprep.subr.mxu0 0.0
    %1596 = vmatpush1.msra.mxu0 0.0
    %1597 = vmatprep.subr.mxu0 0.0
    %1598 = vmatpush1.msra.mxu0 0.0
    %1599 = vmatprep.subr.mxu0 0.0
    %1600 = vmatpush1.msra.mxu0 0.0
    %1601 = vmatprep.subr.mxu0 0.0
    %1602 = vmatpush1.msra.mxu0 0.0
    %1603 = vmatprep.subr.mxu0 0.0
    %1604 = vmatpush1.msra.mxu0 0.0
    %1605 = vmatprep.subr.mxu0 0.0
    %1606 = vmatpush1.msra.mxu0 0.0
    %1607 = vmatprep.subr.mxu0 0.0
    %1608 = vmatpush1.msra.mxu0 0.0
    %1609 = vmatprep.subr.mxu0 0.0
    %1610 = vmatpush1.msra.mxu0 0.0
    %1611 = vmatprep.subr.mxu0 0.0
    %1612 = vmatpush1.msra.mxu0 0.0
    %1613 = vmatprep.subr.mxu0 0.0
    %1614 = vmatpush1.msra.mxu0 0.0
    %1615 = vmatprep.subr.mxu0 0.0
    %1616 = vmatpush1.msra.mxu0 0.0
    %1617 = vmatprep.subr.mxu0 0.0
    %1618 = vmatpush1.msra.mxu0 0.0
    %1619 = vmatprep.mubr.f32.mxu0 0.0
    %1620 = vmatmul.mubr.f32.gmra.mrb[0].mxu0 %v1550
    %v1621 = vpop.f32.mrb[0].mxu0
    %v1622 = vadd.f32 0.0, %v1621
    %v1623 = vpop.f32.mrb[0].mxu0
    %1624 = vmatprep.mubr.f32.mxu0 0.0
    %1625 = vmatmul.mubr.f32.gmra.mrb[0].mxu0 %v1553
    %v1626 = vpop.f32.mrb[0].mxu0
    %v1627 = vadd.f32 0.0, %v1626
    %v1628 = vpop.f32.mrb[0].mxu0
    %1629 = vdwg.mxu0
    %vm1630 = vcmp.gt.f32.partialorder %v1622, 0.0
    %vm1631 = vcmp.gt.f32.partialorder %v1627, 0.0
    %v1632 = vmin.f32 %v1622, 0.0
    %v1633 = vmin.f32 %v1627, 0.0
    %v1634 = vmul.f32 %v1632, 1.442695
    %v1635 = vpow.pop %v1634
    %v1636 = vmul.f32 %v1633, 1.442695
    %v1637 = vpow.pop %v1636
    %v1638 = vsub.f32 %v1635, 1.0
    %v1639 = vsub.f32 %v1637, 1.0
    %v1640 = vsel %vm1630, %v1622, %v1638
    %v1641 = vsel %vm1631, %v1627, %v1639
    %v1642 = vsel %vm29, %v1640, -inf
    %v1643 = vsel %vm29, %v1641, -inf
    %v1644 = vmax.f32 %v1642, %v1643
    %v1645 = vrot.slane %v1644, 4
    %v1646 = vmax.f32 %v1644, %v1645
    %v1647 = vrot.slane %v1646, 2
    %v1648 = vmax.f32 %v1646, %v1647
    %v1649 = vrot.slane %v1648, 1
    %v1650 = vmax.f32 %v1648, %v1649
    %1651 = vset.pattern.permute.xlu0 3
    %1652 = vperm.xlu0 %1651, %v221
    %v1653 = vpop.permute.xlu0 %1652
    %1655 = vset.pattern.permute.xlu0 3
    %1656 = vperm.xlu0 %1655, %v226
    %v1657 = vpop.permute.xlu0 %1656
    %v1659 = vadd.f32 %v1653, %v1504
    %v1660 = vadd.f32 %v1657, %v1504
    %vm1661 = vcmp.gt.f32.partialorder %v1659, 0.0
    %vm1662 = vcmp.gt.f32.partialorder %v1660, 0.0
    %v1663 = vmul.f32 %v1659, 0.2
    %v1664 = vmul.f32 %v1660, 0.2
    %v1665 = vsel %vm1661, %v1659, %v1663
    %v1666 = vsel %vm1662, %v1660, %v1664
    %1669 = vrot.lane.b32.xlu0 %v1665, 112
    %v1670 = vpop.permute.xlu0 %1669
    %1671 = vrot.lane.b32.xlu0 %v1666, 112
    %v1672 = vpop.permute.xlu0 %1671
    %v1675 = vsel %vm484, %v1670, -9e+15
    %v1676 = vsel %vm485, %v1672, -9e+15
    %v1677 = vsel %vm332, %v1675, -inf
    %1678 = vmax.xlane.f32.xlu0 %v1677
    %v1679 = vpop.xlane.xlu0 %1678
    %v1680 = vsel %vm332, %v1676, -inf
    %1681 = vmax.xlane.f32.xlu0 %v1680
    %v1682 = vpop.xlane.xlu0 %1681
    %v1683 = vsub.f32 %v1675, %v1679
    %v1684 = vsub.f32 %v1676, %v1682
    %v1685 = vmul.f32 %v1683, 1.442695
    %v1686 = vpow.pop %v1685
    %v1687 = vmul.f32 %v1684, 1.442695
    %v1688 = vpow.pop %v1687
    %v1689 = vsel %vm332, %v1686, 0.0
    %1690 = vadd.xlane.f32.xlu0 %v1689
    %v1691 = vpop.xlane.xlu0 %1690
    %v1692 = vsel %vm332, %v1688, 0.0
    %1693 = vadd.xlane.f32.xlu0 %v1692
    %v1694 = vpop.xlane.xlu0 %1693
    %v1695 = vrcp.pop %v1691
    %v1696 = vrcp.pop %v1694
    %v1697 = vmul.f32 %v1691, %v1695
    %v1698 = vmul.f32 %v1694, %v1696
    %v1699 = vsub.f32 2.0, %v1697
    %v1700 = vsub.f32 2.0, %v1698
    %v1701 = vmul.f32 %v1695, %v1699
    %v1702 = vmul.f32 %v1696, %v1700
    %v1703 = vmul.f32 %v1686, %v1701
    %v1704 = vmul.f32 %v1688, %v1702
    %1705 = vrot.lane.b32.xlu0 %v119, 104
    %v1706 = vpop.permute.xlu0 %1705
    %1707 = vrot.lane.b32.xlu0 %v124, 104
    %v1708 = vpop.permute.xlu0 %1707
    %v1712 = vsel %vm332, %v1703, 0
    %v1715 = vsel %vm332, %v1704, 0
    %1717 = vmatprep.subr.mxu0 0.0
    %1718 = vmatpush1.msra.mxu0 %v1706
    %1719 = vmatprep.subr.mxu0 0.0
    %1720 = vmatpush1.msra.mxu0 %v1708
    %1721 = vmatprep.subr.mxu0 0.0
    %1722 = vmatpush1.msra.mxu0 0.0
    %1723 = vmatprep.subr.mxu0 0.0
    %1724 = vmatpush1.msra.mxu0 0.0
    %1725 = vmatprep.subr.mxu0 0.0
    %1726 = vmatpush1.msra.mxu0 0.0
    %1727 = vmatprep.subr.mxu0 0.0
    %1728 = vmatpush1.msra.mxu0 0.0
    %1729 = vmatprep.subr.mxu0 0.0
    %1730 = vmatpush1.msra.mxu0 0.0
    %1731 = vmatprep.subr.mxu0 0.0
    %1732 = vmatpush1.msra.mxu0 0.0
    %1733 = vmatprep.subr.mxu0 0.0
    %1734 = vmatpush1.msra.mxu0 0.0
    %1735 = vmatprep.subr.mxu0 0.0
    %1736 = vmatpush1.msra.mxu0 0.0
    %1737 = vmatprep.subr.mxu0 0.0
    %1738 = vmatpush1.msra.mxu0 0.0
    %1739 = vmatprep.subr.mxu0 0.0
    %1740 = vmatpush1.msra.mxu0 0.0
    %1741 = vmatprep.subr.mxu0 0.0
    %1742 = vmatpush1.msra.mxu0 0.0
    %1743 = vmatprep.subr.mxu0 0.0
    %1744 = vmatpush1.msra.mxu0 0.0
    %1745 = vmatprep.subr.mxu0 0.0
    %1746 = vmatpush1.msra.mxu0 0.0
    %1747 = vmatprep.subr.mxu0 0.0
    %1748 = vmatpush1.msra.mxu0 0.0
    %1749 = vmatprep.subr.mxu0 0.0
    %1750 = vmatpush1.msra.mxu0 0.0
    %1751 = vmatprep.subr.mxu0 0.0
    %1752 = vmatpush1.msra.mxu0 0.0
    %1753 = vmatprep.subr.mxu0 0.0
    %1754 = vmatpush1.msra.mxu0 0.0
    %1755 = vmatprep.subr.mxu0 0.0
    %1756 = vmatpush1.msra.mxu0 0.0
    %1757 = vmatprep.subr.mxu0 0.0
    %1758 = vmatpush1.msra.mxu0 0.0
    %1759 = vmatprep.subr.mxu0 0.0
    %1760 = vmatpush1.msra.mxu0 0.0
    %1761 = vmatprep.subr.mxu0 0.0
    %1762 = vmatpush1.msra.mxu0 0.0
    %1763 = vmatprep.subr.mxu0 0.0
    %1764 = vmatpush1.msra.mxu0 0.0
    %1765 = vmatprep.subr.mxu0 0.0
    %1766 = vmatpush1.msra.mxu0 0.0
    %1767 = vmatprep.subr.mxu0 0.0
    %1768 = vmatpush1.msra.mxu0 0.0
    %1769 = vmatprep.subr.mxu0 0.0
    %1770 = vmatpush1.msra.mxu0 0.0
    %1771 = vmatprep.subr.mxu0 0.0
    %1772 = vmatpush1.msra.mxu0 0.0
    %1773 = vmatprep.subr.mxu0 0.0
    %1774 = vmatpush1.msra.mxu0 0.0
    %1775 = vmatprep.subr.mxu0 0.0
    %1776 = vmatpush1.msra.mxu0 0.0
    %1777 = vmatprep.subr.mxu0 0.0
    %1778 = vmatpush1.msra.mxu0 0.0
    %1779 = vmatprep.subr.mxu0 0.0
    %1780 = vmatpush1.msra.mxu0 0.0
    %1781 = vmatprep.mubr.f32.mxu0 0.0
    %1782 = vmatmul.mubr.f32.gmra.mrb[0].mxu0 %v1712
    %v1783 = vpop.f32.mrb[0].mxu0
    %v1784 = vadd.f32 0.0, %v1783
    %v1785 = vpop.f32.mrb[0].mxu0
    %1786 = vmatprep.mubr.f32.mxu0 0.0
    %1787 = vmatmul.mubr.f32.gmra.mrb[0].mxu0 %v1715
    %v1788 = vpop.f32.mrb[0].mxu0
    %v1789 = vadd.f32 0.0, %v1788
    %v1790 = vpop.f32.mrb[0].mxu0
    %1791 = vdwg.mxu0
    %vm1792 = vcmp.gt.f32.partialorder %v1784, 0.0
    %vm1793 = vcmp.gt.f32.partialorder %v1789, 0.0
    %v1794 = vmin.f32 %v1784, 0.0
    %v1795 = vmin.f32 %v1789, 0.0
    %v1796 = vmul.f32 %v1794, 1.442695
    %v1797 = vpow.pop %v1796
    %v1798 = vmul.f32 %v1795, 1.442695
    %v1799 = vpow.pop %v1798
    %v1800 = vsub.f32 %v1797, 1.0
    %v1801 = vsub.f32 %v1799, 1.0
    %v1802 = vsel %vm1792, %v1784, %v1800
    %v1803 = vsel %vm1793, %v1789, %v1801
    %v1804 = vsel %vm29, %v1802, -inf
    %v1805 = vsel %vm29, %v1803, -inf
    %v1806 = vmax.f32 %v1804, %v1805
    %v1807 = vrot.slane %v1806, 4
    %v1808 = vmax.f32 %v1806, %v1807
    %v1809 = vrot.slane %v1808, 2
    %v1810 = vmax.f32 %v1808, %v1809
    %v1811 = vrot.slane %v1810, 1
    %v1812 = vmax.f32 %v1810, %v1811
    %v1813 = vsel %vm626, %v1650, %v1812
    %v1815 = vsel %vm29, %v1813, 0
    %1817 = vmatprep.subr.mxu0 0.0
    %1818 = vmatpush1.msra.mxu0 %v1492
    %1819 = vmatprep.subr.mxu0 0.0
    %1820 = vmatpush1.msra.mxu0 0.0
    %1821 = vmatprep.subr.mxu0 0.0
    %1822 = vmatpush1.msra.mxu0 0.0
    %1823 = vmatprep.subr.mxu0 0.0
    %1824 = vmatpush1.msra.mxu0 0.0
    %1825 = vmatprep.subr.mxu0 0.0
    %1826 = vmatpush1.msra.mxu0 0.0
    %1827 = vmatprep.subr.mxu0 0.0
    %1828 = vmatpush1.msra.mxu0 0.0
    %1829 = vmatprep.subr.mxu0 0.0
    %1830 = vmatpush1.msra.mxu0 0.0
    %1831 = vmatprep.subr.mxu0 0.0
    %1832 = vmatpush1.msra.mxu0 0.0
    %1833 = vmatprep.subr.mxu0 0.0
    %1834 = vmatpush1.msra.mxu0 0.0
    %1835 = vmatprep.subr.mxu0 0.0
    %1836 = vmatpush1.msra.mxu0 0.0
    %1837 = vmatprep.subr.mxu0 0.0
    %1838 = vmatpush1.msra.mxu0 0.0
    %1839 = vmatprep.subr.mxu0 0.0
    %1840 = vmatpush1.msra.mxu0 0.0
    %1841 = vmatprep.subr.mxu0 0.0
    %1842 = vmatpush1.msra.mxu0 0.0
    %1843 = vmatprep.subr.mxu0 0.0
    %1844 = vmatpush1.msra.mxu0 0.0
    %1845 = vmatprep.subr.mxu0 0.0
    %1846 = vmatpush1.msra.mxu0 0.0
    %1847 = vmatprep.subr.mxu0 0.0
    %1848 = vmatpush1.msra.mxu0 0.0
    %1849 = vmatprep.subr.mxu0 0.0
    %1850 = vmatpush1.msra.mxu0 0.0
    %1851 = vmatprep.subr.mxu0 0.0
    %1852 = vmatpush1.msra.mxu0 0.0
    %1853 = vmatprep.subr.mxu0 0.0
    %1854 = vmatpush1.msra.mxu0 0.0
    %1855 = vmatprep.subr.mxu0 0.0
    %1856 = vmatpush1.msra.mxu0 0.0
    %1857 = vmatprep.subr.mxu0 0.0
    %1858 = vmatpush1.msra.mxu0 0.0
    %1859 = vmatprep.subr.mxu0 0.0
    %1860 = vmatpush1.msra.mxu0 0.0
    %1861 = vmatprep.subr.mxu0 0.0
    %1862 = vmatpush1.msra.mxu0 0.0
    %1863 = vmatprep.subr.mxu0 0.0
    %1864 = vmatpush1.msra.mxu0 0.0
    %1865 = vmatprep.subr.mxu0 0.0
    %1866 = vmatpush1.msra.mxu0 0.0
    %1867 = vmatprep.subr.mxu0 0.0
    %1868 = vmatpush1.msra.mxu0 0.0
    %1869 = vmatprep.subr.mxu0 0.0
    %1870 = vmatpush1.msra.mxu0 0.0
    %1871 = vmatprep.subr.mxu0 0.0
    %1872 = vmatpush1.msra.mxu0 0.0
    %1873 = vmatprep.subr.mxu0 0.0
    %1874 = vmatpush1.msra.mxu0 0.0
    %1875 = vmatprep.subr.mxu0 0.0
    %1876 = vmatpush1.msra.mxu0 0.0
    %1877 = vmatprep.subr.mxu0 0.0
    %1878 = vmatpush1.msra.mxu0 0.0
    %1879 = vmatprep.subr.mxu0 0.0
    %1880 = vmatpush1.msra.mxu0 0.0
    %1881 = vmatprep.mubr.f32.mxu0 0.0
    %1882 = vmatmul.mubr.f32.gmra.mrb[0].mxu0 %v1815
    %v1883 = vpop.f32.mrb[0].mxu0
    %v1884 = vadd.f32 0.0, %v1883
    %v1885 = vpop.f32.mrb[0].mxu0
    %1886 = vdwg.mxu0
    %v1887 = vadd.f32 %v1491, %v1884
    %vm1888 = vcmask 25600
    %1889 = vst.msk [vmem:[#allocation2] sm:$0x3] %vm1888, %v1887
    // Predicated region
    $region26: #{gat_forward.1} parent=1 // pred_check
      _
    $region27: #{gat_forward.1} parent=1 // pred_check_branch
      %1891 = sbr.rel (0) target = $region29
    $region28: #{gat_forward.1} parent=1 // pred_region
      %s1893 = ssub.s32 32, 32
      %1894 = vsyncadd [#allocation3], %s1893
      %s1896 = sshll.u32 [#allocation2], 4
      %s1897 = int_to_ptr.vmem [resolvable:$true] %s1896
      %1899 = dma.vmem_to_hbm [thread:$0]  %s1897, 32, %s6, [#allocation3]
    $region29: #{gat_forward.1} parent=1 // pred_fallthru
      _
    // Predicated region
    $region30: #{gat_forward.1} parent=1 // pred_check
      _
    $region31: #{gat_forward.1} parent=1 // pred_check_branch
      %1901 = sbr.rel (0) target = $region33
    $region32: #{gat_forward.1} parent=1 // pred_region
      %1902 = dma.done [#allocation3], 32
    $region33: #{gat_forward.1} parent=1 // pred_fallthru
      _
    %1903 = vsyncpa [#allocation3], 1

</llo_original>
